<compile_context>
chip_gen: v7x
topology: tpu7x:2x2x1
jax: 0.10.0
libtpu: 0.0.40
codegen_flags: <defaults>
</compile_context>

<pallas_src>
import functools

import jax
import jax.numpy as jnp
from jax.experimental import pallas as pl
from jax.experimental.pallas import tpu as pltpu


_LANE = 128                                # embedding dim padded to this
# Keep the whole bf16 E operand VMEM-resident per layer only while it (plus the
# G double-buffers and the output tiles) comfortably fits the smallest scoped
# VMEM budget across chips (v7x: 64 MiB physical / 32 MiB scoped default).
_RESIDENT_E_MAX_BYTES = 16 * 1024 * 1024
_VMEM_LIMIT_BYTES = 32 * 1024 * 1024


def _round_up(x, m):
    return ((x + m - 1) // m) * m


def _choose_tiles(n):
    """(row tile, reduction tile, padded N) for the (n, n) adjacency matmul."""
    n_pad = _round_up(n, _LANE)                 # only (8,128) alignment padding
    # Large row tile cuts E re-streams (HBM traffic is the binding resource),
    # but keep >= ~4 row tiles so the v7x megacore ("parallel" axis) has work.
    tm = max(_LANE, min(2048, _round_up(n_pad // 4, _LANE)))
    tm = min(tm, n_pad)
    tk = min(512, tm)
    tm = (tm // tk) * tk                        # keep tk | tm
    n_pad = _round_up(n_pad, tm)                # at most tm-1 extra zero rows
    return tm, tk, n_pad


# ----------------------------------------------------------------------------
# Kernel 1: one propagation layer  E_{l+1} = G @ E_l  (tiled, bf16 MXU, f32 out)
# ----------------------------------------------------------------------------
def _spmm_stream_kernel(g_ref, e_ref, out_ref, out_bf16_ref):
    @pl.when(pl.program_id(1) == 0)
    def _():
        out_ref[...] = jnp.zeros_like(out_ref)

    # f32 output block is resident across the k axis -> accumulate in place.
    out_ref[...] += jnp.dot(g_ref[...], e_ref[...],
                            preferred_element_type=jnp.float32)

    @pl.when(pl.program_id(1) == pl.num_programs(1) - 1)
    def _():
        out_bf16_ref[...] = out_ref[...].astype(jnp.bfloat16)


def _spmm_resident_kernel(tk, g_ref, e_ref, out_ref, out_bf16_ref):
    @pl.when(pl.program_id(1) == 0)
    def _():
        out_ref[...] = jnp.zeros_like(out_ref)

    k0 = pl.multiple_of(pl.program_id(1) * tk, tk)
    out_ref[...] += jnp.dot(g_ref[...], e_ref[pl.ds(k0, tk), :],
                            preferred_element_type=jnp.float32)

    @pl.when(pl.program_id(1) == pl.num_programs(1) - 1)
    def _():
        out_bf16_ref[...] = out_ref[...].astype(jnp.bfloat16)


def propagate_layer(g_bf16, e_bf16, tm, tk, resident_e):
    """E_{l+1} = G @ E_l as a tiled, pipelined bf16 MXU matmul (f32 accumulate).

    Returns both the f32 result (for the layer sum) and a bf16 copy (the next
    layer's input) so no separate XLA f32->bf16 pass over (Np, Dp) is needed.
    """
    Np, Dp = e_bf16.shape
    grid = (Np // tm, Np // tk)
    if resident_e:
        # DMA the whole E once per layer instead of once per row tile.
        e_spec = pl.BlockSpec((Np, Dp), lambda i, k: (0, 0))
        kernel = functools.partial(_spmm_resident_kernel, tk)
    else:
        e_spec = pl.BlockSpec((tk, Dp), lambda i, k: (k, 0))
        kernel = _spmm_stream_kernel
    return pl.pallas_call(
        kernel,
        out_shape=(jax.ShapeDtypeStruct((Np, Dp), jnp.float32),
                   jax.ShapeDtypeStruct((Np, Dp), jnp.bfloat16)),
        grid=grid,
        in_specs=[pl.BlockSpec((tm, tk), lambda i, k: (i, k)), e_spec],
        out_specs=(pl.BlockSpec((tm, Dp), lambda i, k: (i, 0)),
                   pl.BlockSpec((tm, Dp), lambda i, k: (i, 0))),
        compiler_params=pltpu.CompilerParams(
            dimension_semantics=("parallel", "arbitrary"),
            vmem_limit_bytes=_VMEM_LIMIT_BYTES),
    )(g_bf16, e_bf16)


# ----------------------------------------------------------------------------
# Kernel 2: BPR loss + embedding reg + SGL InfoNCE (fused, q-row tiled)
# ----------------------------------------------------------------------------
def _row_normalize(x):
    # F.normalize(x, p=2, dim=1); rsqrt runs on the EUP slot.
    sumsq = jnp.sum(x * x, axis=1, keepdims=True)
    return x * jax.lax.rsqrt(jnp.maximum(sumsq, 1e-24))


def _loss_kernel(u_ref, pos_ref, neg_ref,
                 upre_ref, ppre_ref, npre_ref,
                 zu_ref, zuu_ref, zi_ref, zii_ref,
                 out_ref, *, temp, emb_reg, ssl_reg, batch, tq):
    q = pl.program_id(0)

    @pl.when(q == 0)
    def _():
        out_ref[...] = jnp.zeros_like(out_ref)

    inv_b = 1.0 / batch
    row_id = q * tq + jax.lax.broadcasted_iota(jnp.int32, (tq, 1), 0)
    row_valid = (row_id < batch).astype(jnp.float32)      # mask padded rows

    # ---- BPR: mean(softplus(neg_score - pos_score)) ----
    u = u_ref[...]
    pos_s = jnp.sum(u * pos_ref[...], axis=1, keepdims=True)
    neg_s = jnp.sum(u * neg_ref[...], axis=1, keepdims=True)
    x = neg_s - pos_s
    softplus = jnp.maximum(x, 0.0) + jnp.log(1.0 + jnp.exp(-jnp.abs(x)))
    bpr = jnp.sum(softplus * row_valid) * inv_b

    # ---- embedding reg: ||.||_2^2 of the pre-propagation embeddings ----
    # (padded rows / lanes are zero, so they contribute nothing)
    emb = emb_reg * (jnp.sum(upre_ref[...] * upre_ref[...])
                     + jnp.sum(ppre_ref[...] * ppre_ref[...])
                     + jnp.sum(npre_ref[...] * npre_ref[...]))

    # ---- SGL InfoNCE on the two augmented views (q-row block vs all keys) ----
    # TODO(synk): `cal_loss` is not defined in the reference module; this is the
    # standard SGL InfoNCE, written as logsumexp_j(sim_ij/t) - pos_i/t.
    inv_t = 1.0 / temp
    n_keys = zuu_ref.shape[0]
    key_valid = jax.lax.broadcasted_iota(jnp.int32, (1, n_keys), 1) < batch
    q0 = pl.multiple_of(q * tq, tq)

    def infonce(a_blk_ref, b_full_ref):
        a = _row_normalize(a_blk_ref[...])                            # (tq, D)
        b = _row_normalize(b_full_ref[...])                           # (Bp, D)
        b_pos = _row_normalize(b_full_ref[pl.ds(q0, tq), :])          # (tq, D)
        pos = jnp.sum(a * b_pos, axis=1, keepdims=True) * inv_t       # (tq, 1)
        sim = jax.lax.dot_general(a, b, (((1,), (1,)), ((), ())),
                                  preferred_element_type=jnp.float32) * inv_t
        sim = jnp.where(key_valid, sim, -1e30)                        # mask pads
        m = jnp.max(sim, axis=1, keepdims=True)
        lse = m + jnp.log(jnp.sum(jnp.exp(sim - m), axis=1, keepdims=True))
        return jnp.sum((lse - pos) * row_valid) * inv_b

    cse = ssl_reg * (infonce(zu_ref, zuu_ref) + infonce(zi_ref, zii_ref))

    # pack the scalars into one lane-dense (1, 128) accumulator; lane 1 stays
    # zero, matching `svd_loss = torch.tensor(0)` in the reference.
    lane = jax.lax.broadcasted_iota(jnp.int32, (1, 128), 1)
    out_ref[...] += (jnp.where(lane == 0, bpr, 0.0)
                     + jnp.where(lane == 2, cse, 0.0)
                     + jnp.where(lane == 3, emb, 0.0))


def compute_losses(u_emb, pos_emb, neg_emb, u_pre, pos_pre, neg_pre,
                   zu_u, zuu_u, zi_i, zii_i, *, temp, emb_reg, ssl_reg):
    B, Dp = u_emb.shape
    tq = min(256, _round_up(B, 8))     # q-row tile of the (B, B) similarities
    Bp = _round_up(B, tq)

    def pad_rows(a):
        return jnp.pad(a, ((0, Bp - B), (0, 0)))

    args = tuple(pad_rows(a) for a in (u_emb, pos_emb, neg_emb,
                                       u_pre, pos_pre, neg_pre,
                                       zu_u, zuu_u, zi_i, zii_i))

    tiled = pl.BlockSpec((tq, Dp), lambda q: (q, 0))
    full = pl.BlockSpec((Bp, Dp), lambda q: (0, 0))   # key side, VMEM-resident

    out = pl.pallas_call(
        functools.partial(_loss_kernel, temp=temp, emb_reg=emb_reg,
                          ssl_reg=ssl_reg, batch=B, tq=tq),
        out_shape=jax.ShapeDtypeStruct((1, 128), jnp.float32),
        grid=(Bp // tq,),
        in_specs=[tiled, tiled, tiled, tiled, tiled, tiled,
                  tiled, full, tiled, full],
        out_specs=pl.BlockSpec((1, 128), lambda q: (0, 0)),
        compiler_params=pltpu.CompilerParams(
            dimension_semantics=("arbitrary",)),
    )(*args)
    return out[0, 0], out[0, 1], out[0, 2], out[0, 3]


# ----------------------------------------------------------------------------
# Glue: parameter / graph construction and the full forward
# ----------------------------------------------------------------------------
def xavier_normal(key, num_rows, dim):
    # nn.init.xavier_normal_ on an (num_rows, dim) embedding weight
    std = (2.0 / (num_rows + dim)) ** 0.5
    return std * jax.random.normal(key, (num_rows, dim), jnp.float32)


def edge_drop(values, key, percent):
    # Replicates SGL.ED: zero out int(E * percent) randomly chosen entries.
    n_edges = values.shape[0]
    num_zeros = int(n_edges * percent)
    idx = jax.random.permutation(key, n_edges)[:num_zeros]
    return values.at[idx].set(0.0)


def build_graph(n_users, n_items, key, dropout):
    # Reference aliasing: ED mutates G_values IN PLACE and returns it, so
    # G_values == G_values1 == G_values2 (doubly edge-dropped) and all three
    # propagation branches see the SAME adjacency -> one dense normalized
    # adjacency, built directly in bf16, reused for all three views.
    # TODO(synk): for production graph sizes keep G sparse (CSR row blocks +
    # scalar-prefetch manual-DMA kernel) instead of densifying to (N, N).
    N = n_users + n_items
    h_list, t_list = [], []
    for u in range(n_users):
        its = {u % n_items, (u * 3 + 1) % n_items, (u * 7 + 2) % n_items}
        for it in sorted(its):
            h_list += [u, n_users + it]
            t_list += [n_users + it, u]
    h = jnp.array(h_list, jnp.int32)
    t = jnp.array(t_list, jnp.int32)

    deg = jnp.zeros((N,), jnp.float32).at[h].add(1.0)
    d_inv_sqrt = jnp.where(deg > 0, 1.0 / jnp.sqrt(jnp.maximum(deg, 1e-12)), 0.0)
    g_vals = d_inv_sqrt[h] * d_inv_sqrt[t]          # G = D^-1/2 A D^-1/2 (COO)

    k1, k2 = jax.random.split(key)
    g_vals = edge_drop(g_vals, k1, dropout)         # ED call #1 (in-place in torch)
    g_vals = edge_drop(g_vals, k2, dropout)         # ED call #2 on the SAME tensor

    # TODO(synk): bf16 adjacency gives ~0.4% relative error per layer vs the f32
    # reference sparse propagation; swap the scatter dtype to f32 to validate.
    return jnp.zeros((N, N), jnp.bfloat16).at[h, t].set(g_vals.astype(jnp.bfloat16))


def sgl_forward(user_w, item_w, g_dense, users, pos_items, neg_items,
                *, n_layers, temp, emb_reg, ssl_reg):
    n_users, D = user_w.shape
    N = g_dense.shape[0]
    tm, tk, Np = _choose_tiles(N)
    Dp = _round_up(D, _LANE)

    # pad to MXU/lane-friendly shapes; zero padding is an exact no-op for every
    # op below (matmul, norms, dot products).
    g_pad = jnp.pad(g_dense, ((0, Np - N), (0, Np - N)))        # bf16 (Np, Np)
    e0 = jnp.concatenate([user_w, item_w], axis=0)              # (N, D)  f32
    e0 = jnp.pad(e0, ((0, Np - N), (0, Dp - D)))                # (Np, Dp) f32

    resident_e = (Np * Dp * 2) <= _RESIDENT_E_MAX_BYTES

    # multi-layer propagation with layer sum.  The three adjacency views alias
    # in the reference, so ONE propagation serves ua/ia, zu/zi and zuu/zii.
    acc = e0
    cur_bf16 = e0.astype(jnp.bfloat16)
    for _ in range(n_layers):
        cur_f32, cur_bf16 = propagate_layer(g_pad, cur_bf16, tm, tk, resident_e)
        acc = acc + cur_f32
    props = acc[:N]                                             # (N, Dp) f32

    ua, ia = props[:n_users], props[n_users:]
    zu, zi = ua, ia            # aliased augmented view #1
    zuu, zii = ua, ia          # aliased augmented view #2

    u_emb = ua[users]
    pos_emb = ia[pos_items]
    neg_emb = ia[neg_items]

    e0_valid = e0[:N]
    u_pre = e0_valid[users]                    # user_embedding(users), padded
    pos_pre = e0_valid[n_users + pos_items]    # item_embedding(pos_items), padded
    neg_pre = e0_valid[n_users + neg_items]    # item_embedding(neg_items), padded

    # TODO(synk): torch.unique dedup of users/items has no static-shape
    # equivalent; example batches are constructed unique so semantics match
    # (InfoNCE is invariant to row order).
    zu_u, zuu_u = zu[users], zuu[users]
    zi_i, zii_i = zi[pos_items], zii[pos_items]

    return compute_losses(u_emb, pos_emb, neg_emb, u_pre, pos_pre, neg_pre,
                          zu_u, zuu_u, zi_i, zii_i,
                          temp=temp, emb_reg=emb_reg, ssl_reg=ssl_reg)


if __name__ == "__main__":
    # synthetic config (args / data_config analogue)
    n_users, n_items, emb_dim = 16, 16, 32
    n_layers, temp, dropout = 2, 0.2, 0.25
    emb_reg, ssl_reg = 1e-5, 0.1
    batch = 8

    key = jax.random.PRNGKey(0)
    k_u, k_i, k_g, k_b1, k_b2, k_b3 = jax.random.split(key, 6)

    user_w = xavier_normal(k_u, n_users, emb_dim)
    item_w = xavier_normal(k_i, n_items, emb_dim)
    g_dense = build_graph(n_users, n_items, k_g, dropout)

    # unique user / item index batches (see TODO on torch.unique)
    users = jax.random.permutation(k_b1, n_users)[:batch].astype(jnp.int32)
    pos_items = jax.random.permutation(k_b2, n_items)[:batch].astype(jnp.int32)
    neg_items = jax.random.permutation(k_b3, n_items)[:batch].astype(jnp.int32)

    fwd = jax.jit(functools.partial(sgl_forward, n_layers=n_layers, temp=temp,
                                    emb_reg=emb_reg, ssl_reg=ssl_reg))
    bpr_loss, svd_loss, cse_loss, emb_loss = fwd(user_w, item_w, g_dense,
                                                 users, pos_items, neg_items)
    jax.block_until_ready((bpr_loss, svd_loss, cse_loss, emb_loss))
    print("KERNEL_OK")
</pallas_src>

<mosaic_0001>
module attributes {stable_mosaic.version = 11 : i64} {
  func.func @_spmm_resident_kernel(%arg0: i32, %arg1: i32, %arg2: memref<128x128xbf16, #tpu.memory_space<vmem>>, %arg3: memref<128x128xbf16, #tpu.memory_space<vmem>>, %arg4: memref<128x128xf32, #tpu.memory_space<vmem>>, %arg5: memref<128x128xbf16, #tpu.memory_space<vmem>>) attributes {dimension_semantics = [#tpu.dimension_semantics<parallel>, #tpu.dimension_semantics<arbitrary>], iteration_bounds = array<i64: 1, 1>, scalar_prefetch = 0 : i64, scratch_operands = 0 : i64, tpu.core_type = #tpu.core_type<tc>, window_params = [{transform_indices = @transform_0, window_bounds = array<i64: 128, 128>}, {pipeline_mode = #tpu.pipeline_mode<synchronous>, transform_indices = @transform_1, window_bounds = array<i64: 128, 128>}, {transform_indices = @transform_2, window_bounds = array<i64: 128, 128>}, {transform_indices = @transform_3, window_bounds = array<i64: 128, 128>}]} {
    %c0_i32 = arith.constant 0 : i32
    %0 = arith.cmpi eq, %arg1, %c0_i32 : i32
    %1 = arith.extui %0 : i1 to i32
    %c0_i32_0 = arith.constant 0 : i32
    %2 = arith.cmpi ne, %1, %c0_i32_0 : i32
    scf.if %2 {
      %cst_9 = arith.constant 0.000000e+00 : f32
      %15 = vector.broadcast %cst_9 : f32 to vector<128x128xf32>
      %c0_10 = arith.constant 0 : index
      %c0_11 = arith.constant 0 : index
      %16 = vector.load %arg4[%c0_10, %c0_11] : memref<128x128xf32, #tpu.memory_space<vmem>>, vector<128x128xf32>
      tpu.vector_store %arg4[%c0_10, %c0_11], %15 {strides = array<i32>} : memref<128x128xf32, #tpu.memory_space<vmem>>, vector<128x128xf32>,
    } else {
    }
    %c128_i32 = arith.constant 128 : i32
    %3 = arith.muli %arg1, %c128_i32 : i32
    %4 = tpu.assume_multiple %3, 128 : i32
    %c0 = arith.constant 0 : index
    %c0_1 = arith.constant 0 : index
    %5 = vector.load %arg4[%c0, %c0_1] : memref<128x128xf32, #tpu.memory_space<vmem>>, vector<128x128xf32>
    %c0_2 = arith.constant 0 : index
    %c0_3 = arith.constant 0 : index
    %6 = vector.load %arg2[%c0_2, %c0_3] : memref<128x128xbf16, #tpu.memory_space<vmem>>, vector<128x128xbf16>
    %7 = arith.index_cast %4 : i32 to index
    %c0_4 = arith.constant 0 : index
    %8 = vector.load %arg3[%7, %c0_4] : memref<128x128xbf16, #tpu.memory_space<vmem>>, vector<128x128xbf16>
    %cst = arith.constant dense<0.000000e+00> : vector<128x128xf32>
    %9 = tpu.matmul %6, %8, %cst {dimension_numbers = #tpu.dot_dimension_numbers<[1], [0], [0], [1], [0, 0, 1, 1], [], []>} : vector<128x128xbf16>, vector<128x128xbf16>, vector<128x128xf32> -> vector<128x128xf32>
    %10 = arith.addf %5, %9 : vector<128x128xf32>
    %c0_5 = arith.constant 0 : index
    %c0_6 = arith.constant 0 : index
    %11 = vector.load %arg4[%c0_5, %c0_6] : memref<128x128xf32, #tpu.memory_space<vmem>>, vector<128x128xf32>
    tpu.vector_store %arg4[%c0_5, %c0_6], %10 {strides = array<i32>} : memref<128x128xf32, #tpu.memory_space<vmem>>, vector<128x128xf32>,
    %c0_i32_7 = arith.constant 0 : i32
    %12 = arith.cmpi eq, %arg1, %c0_i32_7 : i32
    %13 = arith.extui %12 : i1 to i32
    %c0_i32_8 = arith.constant 0 : i32
    %14 = arith.cmpi ne, %13, %c0_i32_8 : i32
    scf.if %14 {
      %c0_9 = arith.constant 0 : index
      %c0_10 = arith.constant 0 : index
      %15 = vector.load %arg4[%c0_9, %c0_10] : memref<128x128xf32, #tpu.memory_space<vmem>>, vector<128x128xf32>
      %16 = arith.truncf %15 : vector<128x128xf32> to vector<128x128xbf16>
      %c0_11 = arith.constant 0 : index
      %c0_12 = arith.constant 0 : index
      %17 = vector.load %arg5[%c0_11, %c0_12] : memref<128x128xbf16, #tpu.memory_space<vmem>>, vector<128x128xbf16>
      tpu.vector_store %arg5[%c0_11, %c0_12], %16 {strides = array<i32>} : memref<128x128xbf16, #tpu.memory_space<vmem>>, vector<128x128xbf16>,
    } else {
    }
    return
  }
  func.func @transform_0(%arg0: i32, %arg1: i32) -> (i32, i32) {
    %c0_i32 = arith.constant 0 : i32
    return %arg0, %arg1 : i32, i32
  }
  func.func @transform_1(%arg0: i32, %arg1: i32) -> (i32, i32) {
    %c0_i32 = arith.constant 0 : i32
    %c0_i32_0 = arith.constant 0 : i32
    %c0_i32_1 = arith.constant 0 : i32
    return %c0_i32, %c0_i32_0 : i32, i32
  }
  func.func @transform_2(%arg0: i32, %arg1: i32) -> (i32, i32) {
    %c0_i32 = arith.constant 0 : i32
    %c0_i32_0 = arith.constant 0 : i32
    return %arg0, %c0_i32 : i32, i32
  }
  func.func @transform_3(%arg0: i32, %arg1: i32) -> (i32, i32) {
    %c0_i32 = arith.constant 0 : i32
    %c0_i32_0 = arith.constant 0 : i32
    return %arg0, %c0_i32 : i32, i32
  }
}

module attributes {stable_mosaic.version = 11 : i64} {
  func.func @_spmm_resident_kernel(%arg0: i32, %arg1: i32, %arg2: memref<128x128xbf16, #tpu.memory_space<vmem>>, %arg3: memref<128x128xbf16, #tpu.memory_space<vmem>>, %arg4: memref<128x128xf32, #tpu.memory_space<vmem>>, %arg5: memref<128x128xbf16, #tpu.memory_space<vmem>>) attributes {dimension_semantics = [#tpu.dimension_semantics<parallel>, #tpu.dimension_semantics<arbitrary>], iteration_bounds = array<i64: 1, 1>, scalar_prefetch = 0 : i64, scratch_operands = 0 : i64, tpu.core_type = #tpu.core_type<tc>, window_params = [{transform_indices = @transform_0, window_bounds = array<i64: 128, 128>}, {pipeline_mode = #tpu.pipeline_mode<synchronous>, transform_indices = @transform_1, window_bounds = array<i64: 128, 128>}, {transform_indices = @transform_2, window_bounds = array<i64: 128, 128>}, {transform_indices = @transform_3, window_bounds = array<i64: 128, 128>}]} {
    %c0_i32 = arith.constant 0 : i32
    %0 = arith.cmpi eq, %arg1, %c0_i32 : i32
    %1 = arith.extui %0 : i1 to i32
    %c0_i32_0 = arith.constant 0 : i32
    %2 = arith.cmpi ne, %1, %c0_i32_0 : i32
    scf.if %2 {
      %cst_9 = arith.constant 0.000000e+00 : f32
      %15 = vector.broadcast %cst_9 : f32 to vector<128x128xf32>
      %c0_10 = arith.constant 0 : index
      %c0_11 = arith.constant 0 : index
      %16 = vector.load %arg4[%c0_10, %c0_11] : memref<128x128xf32, #tpu.memory_space<vmem>>, vector<128x128xf32>
      tpu.vector_store %arg4[%c0_10, %c0_11], %15 {strides = array<i32>} : memref<128x128xf32, #tpu.memory_space<vmem>>, vector<128x128xf32>,
    } else {
    }
    %c128_i32 = arith.constant 128 : i32
    %3 = arith.muli %arg1, %c128_i32 : i32
    %4 = tpu.assume_multiple %3, 128 : i32
    %c0 = arith.constant 0 : index
    %c0_1 = arith.constant 0 : index
    %5 = vector.load %arg4[%c0, %c0_1] : memref<128x128xf32, #tpu.memory_space<vmem>>, vector<128x128xf32>
    %c0_2 = arith.constant 0 : index
    %c0_3 = arith.constant 0 : index
    %6 = vector.load %arg2[%c0_2, %c0_3] : memref<128x128xbf16, #tpu.memory_space<vmem>>, vector<128x128xbf16>
    %7 = arith.index_cast %4 : i32 to index
    %c0_4 = arith.constant 0 : index
    %8 = vector.load %arg3[%7, %c0_4] : memref<128x128xbf16, #tpu.memory_space<vmem>>, vector<128x128xbf16>
    %cst = arith.constant dense<0.000000e+00> : vector<128x128xf32>
    %9 = tpu.matmul %6, %8, %cst {dimension_numbers = #tpu.dot_dimension_numbers<[1], [0], [0], [1], [0, 0, 1, 1], [], []>} : vector<128x128xbf16>, vector<128x128xbf16>, vector<128x128xf32> -> vector<128x128xf32>
    %10 = arith.addf %5, %9 : vector<128x128xf32>
    %c0_5 = arith.constant 0 : index
    %c0_6 = arith.constant 0 : index
    %11 = vector.load %arg4[%c0_5, %c0_6] : memref<128x128xf32, #tpu.memory_space<vmem>>, vector<128x128xf32>
    tpu.vector_store %arg4[%c0_5, %c0_6], %10 {strides = array<i32>} : memref<128x128xf32, #tpu.memory_space<vmem>>, vector<128x128xf32>,
    %c0_i32_7 = arith.constant 0 : i32
    %12 = arith.cmpi eq, %arg1, %c0_i32_7 : i32
    %13 = arith.extui %12 : i1 to i32
    %c0_i32_8 = arith.constant 0 : i32
    %14 = arith.cmpi ne, %13, %c0_i32_8 : i32
    scf.if %14 {
      %c0_9 = arith.constant 0 : index
      %c0_10 = arith.constant 0 : index
      %15 = vector.load %arg4[%c0_9, %c0_10] : memref<128x128xf32, #tpu.memory_space<vmem>>, vector<128x128xf32>
      %16 = arith.truncf %15 : vector<128x128xf32> to vector<128x128xbf16>
      %c0_11 = arith.constant 0 : index
      %c0_12 = arith.constant 0 : index
      %17 = vector.load %arg5[%c0_11, %c0_12] : memref<128x128xbf16, #tpu.memory_space<vmem>>, vector<128x128xbf16>
      tpu.vector_store %arg5[%c0_11, %c0_12], %16 {strides = array<i32>} : memref<128x128xbf16, #tpu.memory_space<vmem>>, vector<128x128xbf16>,
    } else {
    }
    return
  }
  func.func @transform_0(%arg0: i32, %arg1: i32) -> (i32, i32) {
    %c0_i32 = arith.constant 0 : i32
    return %arg0, %arg1 : i32, i32
  }
  func.func @transform_1(%arg0: i32, %arg1: i32) -> (i32, i32) {
    %c0_i32 = arith.constant 0 : i32
    %c0_i32_0 = arith.constant 0 : i32
    %c0_i32_1 = arith.constant 0 : i32
    return %c0_i32, %c0_i32_0 : i32, i32
  }
  func.func @transform_2(%arg0: i32, %arg1: i32) -> (i32, i32) {
    %c0_i32 = arith.constant 0 : i32
    %c0_i32_0 = arith.constant 0 : i32
    return %arg0, %c0_i32 : i32, i32
  }
  func.func @transform_3(%arg0: i32, %arg1: i32) -> (i32, i32) {
    %c0_i32 = arith.constant 0 : i32
    %c0_i32_0 = arith.constant 0 : i32
    return %arg0, %c0_i32 : i32, i32
  }
}

module attributes {stable_mosaic.version = 11 : i64} {
  func.func @_loss_kernel(%arg0: i32, %arg1: memref<8x128xf32, #tpu.memory_space<vmem>>, %arg2: memref<8x128xf32, #tpu.memory_space<vmem>>, %arg3: memref<8x128xf32, #tpu.memory_space<vmem>>, %arg4: memref<8x128xf32, #tpu.memory_space<vmem>>, %arg5: memref<8x128xf32, #tpu.memory_space<vmem>>, %arg6: memref<8x128xf32, #tpu.memory_space<vmem>>, %arg7: memref<8x128xf32, #tpu.memory_space<vmem>>, %arg8: memref<8x128xf32, #tpu.memory_space<vmem>>, %arg9: memref<8x128xf32, #tpu.memory_space<vmem>>, %arg10: memref<8x128xf32, #tpu.memory_space<vmem>>, %arg11: memref<1x128xf32, #tpu.memory_space<vmem>>) attributes {dimension_semantics = [#tpu.dimension_semantics<arbitrary>], iteration_bounds = array<i64: 1>, scalar_prefetch = 0 : i64, scratch_operands = 0 : i64, tpu.core_type = #tpu.core_type<tc>, window_params = [{transform_indices = @transform_0, window_bounds = array<i64: 8, 128>}, {transform_indices = @transform_1, window_bounds = array<i64: 8, 128>}, {transform_indices = @transform_2, window_bounds = array<i64: 8, 128>}, {transform_indices = @transform_3, window_bounds = array<i64: 8, 128>}, {transform_indices = @transform_4, window_bounds = array<i64: 8, 128>}, {transform_indices = @transform_5, window_bounds = array<i64: 8, 128>}, {transform_indices = @transform_6, window_bounds = array<i64: 8, 128>}, {pipeline_mode = #tpu.pipeline_mode<synchronous>, transform_indices = @transform_7, window_bounds = array<i64: 8, 128>}, {transform_indices = @transform_8, window_bounds = array<i64: 8, 128>}, {pipeline_mode = #tpu.pipeline_mode<synchronous>, transform_indices = @transform_9, window_bounds = array<i64: 8, 128>}, {pipeline_mode = #tpu.pipeline_mode<synchronous>, transform_indices = @transform_10, window_bounds = array<i64: 1, 128>}]} {
    %c0_i32 = arith.constant 0 : i32
    %0 = arith.cmpi eq, %arg0, %c0_i32 : i32
    %1 = arith.extui %0 : i1 to i32
    %c0_i32_0 = arith.constant 0 : i32
    %2 = arith.cmpi ne, %1, %c0_i32_0 : i32
    scf.if %2 {
      %cst_80 = arith.constant 0.000000e+00 : f32
      %201 = vector.broadcast %cst_80 : f32 to vector<1x128xf32>
      %c0_81 = arith.constant 0 : index
      %c0_82 = arith.constant 0 : index
      %202 = vector.load %arg11[%c0_81, %c0_82] : memref<1x128xf32, #tpu.memory_space<vmem>>, vector<1x128xf32>
      tpu.vector_store %arg11[%c0_81, %c0_82], %201 {strides = array<i32>} : memref<1x128xf32, #tpu.memory_space<vmem>>, vector<1x128xf32>,
    } else {
    }
    %c8_i32 = arith.constant 8 : i32
    %3 = arith.muli %arg0, %c8_i32 : i32
    %4 = tpu.iota {dimensions = array<i32: 0>} : vector<8x1xi32>
    %5 = vector.broadcast %3 : i32 to vector<8x1xi32>
    %6 = arith.addi %5, %4 : vector<8x1xi32>
    %c8_i32_1 = arith.constant 8 : i32
    %7 = vector.broadcast %c8_i32_1 : i32 to vector<8x1xi32>
    %8 = arith.cmpi slt, %6, %7 : vector<8x1xi32>
    %9 = arith.extui %8 : vector<8x1xi1> to vector<8x1xi32>
    %10 = arith.sitofp %9 : vector<8x1xi32> to vector<8x1xf32>
    %c0 = arith.constant 0 : index
    %c0_2 = arith.constant 0 : index
    %11 = vector.load %arg1[%c0, %c0_2] : memref<8x128xf32, #tpu.memory_space<vmem>>, vector<8x128xf32>
    %c0_3 = arith.constant 0 : index
    %c0_4 = arith.constant 0 : index
    %12 = vector.load %arg2[%c0_3, %c0_4] : memref<8x128xf32, #tpu.memory_space<vmem>>, vector<8x128xf32>
    %13 = arith.mulf %11, %12 : vector<8x128xf32>
    %cst = arith.constant dense<0.000000e+00> : vector<8xf32>
    %14 = vector.multi_reduction <add>, %13, %cst [1] : vector<8x128xf32> to vector<8xf32>
    %15 = vector.shape_cast %14 : vector<8xf32> to vector<8x1xf32>
    %c0_5 = arith.constant 0 : index
    %c0_6 = arith.constant 0 : index
    %16 = vector.load %arg3[%c0_5, %c0_6] : memref<8x128xf32, #tpu.memory_space<vmem>>, vector<8x128xf32>
    %17 = arith.mulf %11, %16 : vector<8x128xf32>
    %cst_7 = arith.constant dense<0.000000e+00> : vector<8xf32>
    %18 = vector.multi_reduction <add>, %17, %cst_7 [1] : vector<8x128xf32> to vector<8xf32>
    %19 = vector.shape_cast %18 : vector<8xf32> to vector<8x1xf32>
    %20 = arith.subf %19, %15 : vector<8x1xf32>
    %cst_8 = arith.constant 0.000000e+00 : f32
    %21 = vector.broadcast %cst_8 : f32 to vector<8x1xf32>
    %22 = arith.maximumf %20, %21 : vector<8x1xf32>
    %23 = math.absf %20 : vector<8x1xf32>
    %cst_9 = arith.constant 0.000000e+00 : f32
    %24 = vector.broadcast %cst_9 : f32 to vector<8x1xf32>
    %25 = arith.subf %24, %23 : vector<8x1xf32>
    %26 = math.exp %25 : vector<8x1xf32>
    %cst_10 = arith.constant 1.000000e+00 : f32
    %27 = vector.broadcast %cst_10 : f32 to vector<8x1xf32>
    %28 = arith.addf %27, %26 : vector<8x1xf32>
    %29 = math.log %28 : vector<8x1xf32>
    %30 = arith.addf %22, %29 : vector<8x1xf32>
    %31 = arith.mulf %30, %10 : vector<8x1xf32>
    %32 = vector.shape_cast %31 : vector<8x1xf32> to vector<1x8x1xf32>
    %cst_11 = arith.constant dense<0.000000e+00> : vector<1xf32>
    %33 = vector.multi_reduction <add>, %32, %cst_11 [1, 2] : vector<1x8x1xf32> to vector<1xf32>
    %34 = vector.shape_cast %33 : vector<1xf32> to vector<1x1x1xf32>
    %35 = vector.extract %34[0, 0, 0] : f32 from vector<1x1x1xf32>
    %cst_12 = arith.constant 1.250000e-01 : f32
    %36 = arith.mulf %35, %cst_12 : f32
    %c0_13 = arith.constant 0 : index
    %c0_14 = arith.constant 0 : index
    %37 = vector.load %arg4[%c0_13, %c0_14] : memref<8x128xf32, #tpu.memory_space<vmem>>, vector<8x128xf32>
    %c0_15 = arith.constant 0 : index
    %c0_16 = arith.constant 0 : index
    %38 = vector.load %arg4[%c0_15, %c0_16] : memref<8x128xf32, #tpu.memory_space<vmem>>, vector<8x128xf32>
    %39 = arith.mulf %37, %38 : vector<8x128xf32>
    %40 = vector.shape_cast %39 : vector<8x128xf32> to vector<1x8x128xf32>
    %cst_17 = arith.constant dense<0.000000e+00> : vector<1xf32>
    %41 = vector.multi_reduction <add>, %40, %cst_17 [1, 2] : vector<1x8x128xf32> to vector<1xf32>
    %42 = vector.shape_cast %41 : vector<1xf32> to vector<1x1x1xf32>
    %43 = vector.extract %42[0, 0, 0] : f32 from vector<1x1x1xf32>
    %c0_18 = arith.constant 0 : index
    %c0_19 = arith.constant 0 : index
    %44 = vector.load %arg5[%c0_18, %c0_19] : memref<8x128xf32, #tpu.memory_space<vmem>>, vector<8x128xf32>
    %c0_20 = arith.constant 0 : index
    %c0_21 = arith.constant 0 : index
    %45 = vector.load %arg5[%c0_20, %c0_21] : memref<8x128xf32, #tpu.memory_space<vmem>>, vector<8x128xf32>
    %46 = arith.mulf %44, %45 : vector<8x128xf32>
    %47 = vector.shape_cast %46 : vector<8x128xf32> to vector<1x8x128xf32>
    %cst_22 = arith.constant dense<0.000000e+00> : vector<1xf32>
    %48 = vector.multi_reduction <add>, %47, %cst_22 [1, 2] : vector<1x8x128xf32> to vector<1xf32>
    %49 = vector.shape_cast %48 : vector<1xf32> to vector<1x1x1xf32>
    %50 = vector.extract %49[0, 0, 0] : f32 from vector<1x1x1xf32>
    %51 = arith.addf %43, %50 : f32
    %c0_23 = arith.constant 0 : index
    %c0_24 = arith.constant 0 : index
    %52 = vector.load %arg6[%c0_23, %c0_24] : memref<8x128xf32, #tpu.memory_space<vmem>>, vector<8x128xf32>
    %c0_25 = arith.constant 0 : index
    %c0_26 = arith.constant 0 : index
    %53 = vector.load %arg6[%c0_25, %c0_26] : memref<8x128xf32, #tpu.memory_space<vmem>>, vector<8x128xf32>
    %54 = arith.mulf %52, %53 : vector<8x128xf32>
    %55 = vector.shape_cast %54 : vector<8x128xf32> to vector<1x8x128xf32>
    %cst_27 = arith.constant dense<0.000000e+00> : vector<1xf32>
    %56 = vector.multi_reduction <add>, %55, %cst_27 [1, 2] : vector<1x8x128xf32> to vector<1xf32>
    %57 = vector.shape_cast %56 : vector<1xf32> to vector<1x1x1xf32>
    %58 = vector.extract %57[0, 0, 0] : f32 from vector<1x1x1xf32>
    %59 = arith.addf %51, %58 : f32
    %cst_28 = arith.constant 9.99999974E-6 : f32
    %60 = arith.mulf %cst_28, %59 : f32
    %61 = tpu.iota {dimensions = array<i32: 1>} : vector<1x8xi32>
    %c8_i32_29 = arith.constant 8 : i32
    %62 = vector.broadcast %c8_i32_29 : i32 to vector<1x8xi32>
    %63 = arith.cmpi slt, %61, %62 : vector<1x8xi32>
    %c8_i32_30 = arith.constant 8 : i32
    %64 = arith.muli %arg0, %c8_i32_30 : i32
    %65 = tpu.assume_multiple %64, 8 : i32
    %c0_31 = arith.constant 0 : index
    %c0_32 = arith.constant 0 : index
    %66 = vector.load %arg7[%c0_31, %c0_32] : memref<8x128xf32, #tpu.memory_space<vmem>>, vector<8x128xf32>
    %67 = arith.mulf %66, %66 : vector<8x128xf32>
    %cst_33 = arith.constant dense<0.000000e+00> : vector<8xf32>
    %68 = vector.multi_reduction <add>, %67, %cst_33 [1] : vector<8x128xf32> to vector<8xf32>
    %69 = vector.shape_cast %68 : vector<8xf32> to vector<8x1xf32>
    %cst_34 = arith.constant 1.000000e-24 : f32
    %70 = vector.broadcast %cst_34 : f32 to vector<8x1xf32>
    %71 = arith.maximumf %69, %70 : vector<8x1xf32>
    %72 = math.rsqrt %71 : vector<8x1xf32>
    %73 = vector.broadcast %72 : vector<8x1xf32> to vector<8x128xf32>
    %74 = arith.mulf %66, %73 : vector<8x128xf32>
    %c0_35 = arith.constant 0 : index
    %c0_36 = arith.constant 0 : index
    %75 = vector.load %arg8[%c0_35, %c0_36] : memref<8x128xf32, #tpu.memory_space<vmem>>, vector<8x128xf32>
    %76 = arith.mulf %75, %75 : vector<8x128xf32>
    %cst_37 = arith.constant dense<0.000000e+00> : vector<8xf32>
    %77 = vector.multi_reduction <add>, %76, %cst_37 [1] : vector<8x128xf32> to vector<8xf32>
    %78 = vector.shape_cast %77 : vector<8xf32> to vector<8x1xf32>
    %cst_38 = arith.constant 1.000000e-24 : f32
    %79 = vector.broadcast %cst_38 : f32 to vector<8x1xf32>
    %80 = arith.maximumf %78, %79 : vector<8x1xf32>
    %81 = math.rsqrt %80 : vector<8x1xf32>
    %82 = vector.broadcast %81 : vector<8x1xf32> to vector<8x128xf32>
    %83 = arith.mulf %75, %82 : vector<8x128xf32>
    %84 = arith.index_cast %65 : i32 to index
    %c0_39 = arith.constant 0 : index
    %85 = vector.load %arg8[%84, %c0_39] : memref<8x128xf32, #tpu.memory_space<vmem>>, vector<8x128xf32>
    %86 = arith.mulf %85, %85 : vector<8x128xf32>
    %cst_40 = arith.constant dense<0.000000e+00> : vector<8xf32>
    %87 = vector.multi_reduction <add>, %86, %cst_40 [1] : vector<8x128xf32> to vector<8xf32>
    %88 = vector.shape_cast %87 : vector<8xf32> to vector<8x1xf32>
    %cst_41 = arith.constant 1.000000e-24 : f32
    %89 = vector.broadcast %cst_41 : f32 to vector<8x1xf32>
    %90 = arith.maximumf %88, %89 : vector<8x1xf32>
    %91 = math.rsqrt %90 : vector<8x1xf32>
    %92 = vector.broadcast %91 : vector<8x1xf32> to vector<8x128xf32>
    %93 = arith.mulf %85, %92 : vector<8x128xf32>
    %94 = arith.mulf %74, %93 : vector<8x128xf32>
    %cst_42 = arith.constant dense<0.000000e+00> : vector<8xf32>
    %95 = vector.multi_reduction <add>, %94, %cst_42 [1] : vector<8x128xf32> to vector<8xf32>
    %96 = vector.shape_cast %95 : vector<8xf32> to vector<8x1xf32>
    %cst_43 = arith.constant 5.000000e+00 : f32
    %97 = vector.broadcast %cst_43 : f32 to vector<8x1xf32>
    %98 = arith.mulf %96, %97 : vector<8x1xf32>
    %cst_44 = arith.constant dense<0.000000e+00> : vector<8x8xf32>
    %99 = tpu.matmul %74, %83, %cst_44 {dimension_numbers = #tpu.dot_dimension_numbers<[1], [1], [0], [0], [0, 0, 1, 0], [], []>} : vector<8x128xf32>, vector<8x128xf32>, vector<8x8xf32> -> vector<8x8xf32>
    %cst_45 = arith.constant 5.000000e+00 : f32
    %100 = vector.broadcast %cst_45 : f32 to vector<8x8xf32>
    %101 = arith.mulf %99, %100 : vector<8x8xf32>
    %cst_46 = arith.constant -1.000000e+30 : f32
    %102 = vector.shape_cast %63 : vector<1x8xi1> to vector<1x8xi1>
    %103 = vector.broadcast %102 : vector<1x8xi1> to vector<8x8xi1>
    %104 = vector.broadcast %cst_46 : f32 to vector<8x8xf32>
    %105 = arith.select %103, %101, %104 : vector<8x8xi1>, vector<8x8xf32>
    %cst_47 = arith.constant dense<0xFF800000> : vector<8xf32>
    %106 = vector.multi_reduction <maximumf>, %105, %cst_47 [1] : vector<8x8xf32> to vector<8xf32>
    %107 = vector.shape_cast %106 : vector<8xf32> to vector<8x1xf32>
    %108 = vector.broadcast %107 : vector<8x1xf32> to vector<8x8xf32>
    %109 = arith.subf %105, %108 : vector<8x8xf32>
    %110 = math.exp %109 : vector<8x8xf32>
    %cst_48 = arith.constant dense<0.000000e+00> : vector<8xf32>
    %111 = vector.multi_reduction <add>, %110, %cst_48 [1] : vector<8x8xf32> to vector<8xf32>
    %112 = vector.shape_cast %111 : vector<8xf32> to vector<8x1xf32>
    %113 = math.log %112 : vector<8x1xf32>
    %114 = arith.addf %107, %113 : vector<8x1xf32>
    %115 = arith.subf %114, %98 : vector<8x1xf32>
    %116 = arith.mulf %115, %10 : vector<8x1xf32>
    %117 = vector.shape_cast %116 : vector<8x1xf32> to vector<1x8x1xf32>
    %cst_49 = arith.constant dense<0.000000e+00> : vector<1xf32>
    %118 = vector.multi_reduction <add>, %117, %cst_49 [1, 2] : vector<1x8x1xf32> to vector<1xf32>
    %119 = vector.shape_cast %118 : vector<1xf32> to vector<1x1x1xf32>
    %120 = vector.extract %119[0, 0, 0] : f32 from vector<1x1x1xf32>
    %cst_50 = arith.constant 1.250000e-01 : f32
    %121 = arith.mulf %120, %cst_50 : f32
    %c0_51 = arith.constant 0 : index
    %c0_52 = arith.constant 0 : index
    %122 = vector.load %arg9[%c0_51, %c0_52] : memref<8x128xf32, #tpu.memory_space<vmem>>, vector<8x128xf32>
    %123 = arith.mulf %122, %122 : vector<8x128xf32>
    %cst_53 = arith.constant dense<0.000000e+00> : vector<8xf32>
    %124 = vector.multi_reduction <add>, %123, %cst_53 [1] : vector<8x128xf32> to vector<8xf32>
    %125 = vector.shape_cast %124 : vector<8xf32> to vector<8x1xf32>
    %cst_54 = arith.constant 1.000000e-24 : f32
    %126 = vector.broadcast %cst_54 : f32 to vector<8x1xf32>
    %127 = arith.maximumf %125, %126 : vector<8x1xf32>
    %128 = math.rsqrt %127 : vector<8x1xf32>
    %129 = vector.broadcast %128 : vector<8x1xf32> to vector<8x128xf32>
    %130 = arith.mulf %122, %129 : vector<8x128xf32>
    %c0_55 = arith.constant 0 : index
    %c0_56 = arith.constant 0 : index
    %131 = vector.load %arg10[%c0_55, %c0_56] : memref<8x128xf32, #tpu.memory_space<vmem>>, vector<8x128xf32>
    %132 = arith.mulf %131, %131 : vector<8x128xf32>
    %cst_57 = arith.constant dense<0.000000e+00> : vector<8xf32>
    %133 = vector.multi_reduction <add>, %132, %cst_57 [1] : vector<8x128xf32> to vector<8xf32>
    %134 = vector.shape_cast %133 : vector<8xf32> to vector<8x1xf32>
    %cst_58 = arith.constant 1.000000e-24 : f32
    %135 = vector.broadcast %cst_58 : f32 to vector<8x1xf32>
    %136 = arith.maximumf %134, %135 : vector<8x1xf32>
    %137 = math.rsqrt %136 : vector<8x1xf32>
    %138 = vector.broadcast %137 : vector<8x1xf32> to vector<8x128xf32>
    %139 = arith.mulf %131, %138 : vector<8x128xf32>
    %140 = arith.index_cast %65 : i32 to index
    %c0_59 = arith.constant 0 : index
    %141 = vector.load %arg10[%140, %c0_59] : memref<8x128xf32, #tpu.memory_space<vmem>>, vector<8x128xf32>
    %142 = arith.mulf %141, %141 : vector<8x128xf32>
    %cst_60 = arith.constant dense<0.000000e+00> : vector<8xf32>
    %143 = vector.multi_reduction <add>, %142, %cst_60 [1] : vector<8x128xf32> to vector<8xf32>
    %144 = vector.shape_cast %143 : vector<8xf32> to vector<8x1xf32>
    %cst_61 = arith.constant 1.000000e-24 : f32
    %145 = vector.broadcast %cst_61 : f32 to vector<8x1xf32>
    %146 = arith.maximumf %144, %145 : vector<8x1xf32>
    %147 = math.rsqrt %146 : vector<8x1xf32>
    %148 = vector.broadcast %147 : vector<8x1xf32> to vector<8x128xf32>
    %149 = arith.mulf %141, %148 : vector<8x128xf32>
    %150 = arith.mulf %130, %149 : vector<8x128xf32>
    %cst_62 = arith.constant dense<0.000000e+00> : vector<8xf32>
    %151 = vector.multi_reduction <add>, %150, %cst_62 [1] : vector<8x128xf32> to vector<8xf32>
    %152 = vector.shape_cast %151 : vector<8xf32> to vector<8x1xf32>
    %cst_63 = arith.constant 5.000000e+00 : f32
    %153 = vector.broadcast %cst_63 : f32 to vector<8x1xf32>
    %154 = arith.mulf %152, %153 : vector<8x1xf32>
    %cst_64 = arith.constant dense<0.000000e+00> : vector<8x8xf32>
    %155 = tpu.matmul %130, %139, %cst_64 {dimension_numbers = #tpu.dot_dimension_numbers<[1], [1], [0], [0], [0, 0, 1, 0], [], []>} : vector<8x128xf32>, vector<8x128xf32>, vector<8x8xf32> -> vector<8x8xf32>
    %cst_65 = arith.constant 5.000000e+00 : f32
    %156 = vector.broadcast %cst_65 : f32 to vector<8x8xf32>
    %157 = arith.mulf %155, %156 : vector<8x8xf32>
    %cst_66 = arith.constant -1.000000e+30 : f32
    %158 = vector.shape_cast %63 : vector<1x8xi1> to vector<1x8xi1>
    %159 = vector.broadcast %158 : vector<1x8xi1> to vector<8x8xi1>
    %160 = vector.broadcast %cst_66 : f32 to vector<8x8xf32>
    %161 = arith.select %159, %157, %160 : vector<8x8xi1>, vector<8x8xf32>
    %cst_67 = arith.constant dense<0xFF800000> : vector<8xf32>
    %162 = vector.multi_reduction <maximumf>, %161, %cst_67 [1] : vector<8x8xf32> to vector<8xf32>
    %163 = vector.shape_cast %162 : vector<8xf32> to vector<8x1xf32>
    %164 = vector.broadcast %163 : vector<8x1xf32> to vector<8x8xf32>
    %165 = arith.subf %161, %164 : vector<8x8xf32>
    %166 = math.exp %165 : vector<8x8xf32>
    %cst_68 = arith.constant dense<0.000000e+00> : vector<8xf32>
    %167 = vector.multi_reduction <add>, %166, %cst_68 [1] : vector<8x8xf32> to vector<8xf32>
    %168 = vector.shape_cast %167 : vector<8xf32> to vector<8x1xf32>
    %169 = math.log %168 : vector<8x1xf32>
    %170 = arith.addf %163, %169 : vector<8x1xf32>
    %171 = arith.subf %170, %154 : vector<8x1xf32>
    %172 = arith.mulf %171, %10 : vector<8x1xf32>
    %173 = vector.shape_cast %172 : vector<8x1xf32> to vector<1x8x1xf32>
    %cst_69 = arith.constant dense<0.000000e+00> : vector<1xf32>
    %174 = vector.multi_reduction <add>, %173, %cst_69 [1, 2] : vector<1x8x1xf32> to vector<1xf32>
    %175 = vector.shape_cast %174 : vector<1xf32> to vector<1x1x1xf32>
    %176 = vector.extract %175[0, 0, 0] : f32 from vector<1x1x1xf32>
    %cst_70 = arith.constant 1.250000e-01 : f32
    %177 = arith.mulf %176, %cst_70 : f32
    %178 = arith.addf %121, %177 : f32
    %cst_71 = arith.constant 1.000000e-01 : f32
    %179 = arith.mulf %cst_71, %178 : f32
    %180 = tpu.iota {dimensions = array<i32: 1>} : vector<1x128xi32>
    %c0_72 = arith.constant 0 : index
    %c0_73 = arith.constant 0 : index
    %181 = vector.load %arg11[%c0_72, %c0_73] : memref<1x128xf32, #tpu.memory_space<vmem>>, vector<1x128xf32>
    %c0_i32_74 = arith.constant 0 : i32
    %182 = vector.broadcast %c0_i32_74 : i32 to vector<1x128xi32>
    %183 = arith.cmpi eq, %180, %182 : vector<1x128xi32>
    %cst_75 = arith.constant 0.000000e+00 : f32
    %184 = vector.broadcast %36 : f32 to vector<1x128xf32>
    %185 = vector.broadcast %cst_75 : f32 to vector<1x128xf32>
    %186 = arith.select %183, %184, %185 : vector<1x128xi1>, vector<1x128xf32>
    %c2_i32 = arith.constant 2 : i32
    %187 = vector.broadcast %c2_i32 : i32 to vector<1x128xi32>
    %188 = arith.cmpi eq, %180, %187 : vector<1x128xi32>
    %cst_76 = arith.constant 0.000000e+00 : f32
    %189 = vector.broadcast %179 : f32 to vector<1x128xf32>
    %190 = vector.broadcast %cst_76 : f32 to vector<1x128xf32>
    %191 = arith.select %188, %189, %190 : vector<1x128xi1>, vector<1x128xf32>
    %192 = arith.addf %186, %191 : vector<1x128xf32>
    %c3_i32 = arith.constant 3 : i32
    %193 = vector.broadcast %c3_i32 : i32 to vector<1x128xi32>
    %194 = arith.cmpi eq, %180, %193 : vector<1x128xi32>
    %cst_77 = arith.constant 0.000000e+00 : f32
    %195 = vector.broadcast %60 : f32 to vector<1x128xf32>
    %196 = vector.broadcast %cst_77 : f32 to vector<1x128xf32>
    %197 = arith.select %194, %195, %196 : vector<1x128xi1>, vector<1x128xf32>
    %198 = arith.addf %192, %197 : vector<1x128xf32>
    %199 = arith.addf %181, %198 : vector<1x128xf32>
    %c0_78 = arith.constant 0 : index
    %c0_79 = arith.constant 0 : index
    %200 = vector.load %arg11[%c0_78, %c0_79] : memref<1x128xf32, #tpu.memory_space<vmem>>, vector<1x128xf32>
    tpu.vector_store %arg11[%c0_78, %c0_79], %199 {strides = array<i32>} : memref<1x128xf32, #tpu.memory_space<vmem>>, vector<1x128xf32>,
    return
  }
  func.func @transform_0(%arg0: i32) -> (i32, i32) {
    %c0_i32 = arith.constant 0 : i32
    %c0_i32_0 = arith.constant 0 : i32
    return %arg0, %c0_i32 : i32, i32
  }
  func.func @transform_1(%arg0: i32) -> (i32, i32) {
    %c0_i32 = arith.constant 0 : i32
    %c0_i32_0 = arith.constant 0 : i32
    return %arg0, %c0_i32 : i32, i32
  }
  func.func @transform_2(%arg0: i32) -> (i32, i32) {
    %c0_i32 = arith.constant 0 : i32
    %c0_i32_0 = arith.constant 0 : i32
    return %arg0, %c0_i32 : i32, i32
  }
  func.func @transform_3(%arg0: i32) -> (i32, i32) {
    %c0_i32 = arith.constant 0 : i32
    %c0_i32_0 = arith.constant 0 : i32
    return %arg0, %c0_i32 : i32, i32
  }
  func.func @transform_4(%arg0: i32) -> (i32, i32) {
    %c0_i32 = arith.constant 0 : i32
    %c0_i32_0 = arith.constant 0 : i32
    return %arg0, %c0_i32 : i32, i32
  }
  func.func @transform_5(%arg0: i32) -> (i32, i32) {
    %c0_i32 = arith.constant 0 : i32
    %c0_i32_0 = arith.constant 0 : i32
    return %arg0, %c0_i32 : i32, i32
  }
  func.func @transform_6(%arg0: i32) -> (i32, i32) {
    %c0_i32 = arith.constant 0 : i32
    %c0_i32_0 = arith.constant 0 : i32
    return %arg0, %c0_i32 : i32, i32
  }
  func.func @transform_7(%arg0: i32) -> (i32, i32) {
    %c0_i32 = arith.constant 0 : i32
    %c0_i32_0 = arith.constant 0 : i32
    %c0_i32_1 = arith.constant 0 : i32
    return %c0_i32, %c0_i32_0 : i32, i32
  }
  func.func @transform_8(%arg0: i32) -> (i32, i32) {
    %c0_i32 = arith.constant 0 : i32
    %c0_i32_0 = arith.constant 0 : i32
    return %arg0, %c0_i32 : i32, i32
  }
  func.func @transform_9(%arg0: i32) -> (i32, i32) {
    %c0_i32 = arith.constant 0 : i32
    %c0_i32_0 = arith.constant 0 : i32
    %c0_i32_1 = arith.constant 0 : i32
    return %c0_i32, %c0_i32_0 : i32, i32
  }
  func.func @transform_10(%arg0: i32) -> (i32, i32) {
    %c0_i32 = arith.constant 0 : i32
    %c0_i32_0 = arith.constant 0 : i32
    %c0_i32_1 = arith.constant 0 : i32
    return %c0_i32, %c0_i32_0 : i32, i32
  }
}

</mosaic_0001>

<llo_original>
// kernel: sgl_forward.3
$region0: #{sgl_forward.3}
  #allocation0 [shape = 'u32[]', space=smem, size = 0x4, offset = 0x4, fixed_abs, tag = 'smem constant byte address 0x4 - core index']
  #allocation1 [shape = 'u32[144,128]{1,0:T(1,128)}', space=vmem, size = 0x12000, scoped, tag = 'internal scratch']
  %s0 = inlined_call_operand.vmem [shape: bf16[128,128], index: 0, kind: input, shape index: {}]
  %s1 = inlined_call_operand.vmem [shape: bf16[128,128], index: 1, kind: input, shape index: {}]
  %s2 = inlined_call_operand.vmem [shape: f32[128,128], index: 2, kind: output, shape index: {0}]
  %s3 = inlined_call_operand.vmem [shape: bf16[128,128], index: 3, kind: output, shape index: {1}]
  %4 = xla_tuple %s2, %s3
  %s5 = sld [smem:[#allocation0]]
  $region34: #{sgl_forward.3} parent=0
    _
  %s7 = ssub.s32 1, %s5
  %s8 = scalar_select 0, %s7, %s5
  // Predicated region
  $region2: #{sgl_forward.3} parent=0 // pred_check
    _
  $region3: #{sgl_forward.3} parent=0 // pred_check_branch
    %10 = sbr.rel (0) target = $region5
  $region4: #{sgl_forward.3} parent=0 // pred_region
    _
  $region5: #{sgl_forward.3} parent=0 // pred_fallthru
    _
  // Predicated region
  $region6: #{sgl_forward.3} parent=0 // pred_check
    _
  $region7: #{sgl_forward.3} parent=0 // pred_check_branch
    %12 = sbr.rel (0) target = $region9
  $region8: #{sgl_forward.3} parent=0 // pred_region
    _
  $region9: #{sgl_forward.3} parent=0 // pred_fallthru
    _
  %p14 = scmp.eq.s32.totalorder 0, 0
  // Predicated region
  $region10: #{sgl_forward.3} parent=0 // pred_check
    %p15 = pneg %p14
  $region11: #{sgl_forward.3} parent=0 // pred_check_branch
    %17 = sbr.rel (%p15) target = $region13
  $region12: #{sgl_forward.3} parent=0 // pred_region
    %18 = vst [vmem:[%s2] sm:$0xff] 0.0
    %19 = vst [vmem:[%s2 + $0x8] sm:$0xff] 0.0
    %20 = vst [vmem:[%s2 + $0x10] sm:$0xff] 0.0
    %21 = vst [vmem:[%s2 + $0x18] sm:$0xff] 0.0
    %22 = vst [vmem:[%s2 + $0x20] sm:$0xff] 0.0
    %23 = vst [vmem:[%s2 + $0x28] sm:$0xff] 0.0
    %24 = vst [vmem:[%s2 + $0x30] sm:$0xff] 0.0
    %25 = vst [vmem:[%s2 + $0x38] sm:$0xff] 0.0
    %26 = vst [vmem:[%s2 + $0x40] sm:$0xff] 0.0
    %27 = vst [vmem:[%s2 + $0x48] sm:$0xff] 0.0
    %28 = vst [vmem:[%s2 + $0x50] sm:$0xff] 0.0
    %29 = vst [vmem:[%s2 + $0x58] sm:$0xff] 0.0
    %30 = vst [vmem:[%s2 + $0x60] sm:$0xff] 0.0
    %31 = vst [vmem:[%s2 + $0x68] sm:$0xff] 0.0
    %32 = vst [vmem:[%s2 + $0x70] sm:$0xff] 0.0
    %33 = vst [vmem:[%s2 + $0x78] sm:$0xff] 0.0
  $region13: #{sgl_forward.3} parent=0 // pred_fallthru
    _
  %s34 = smul.u32 0, 128
  %v35 = vld [vmem:[%s2] sm:$0xff]
  %v36 = vld [vmem:[%s2 + $0x8] sm:$0xff]
  %v37 = vld [vmem:[%s2 + $0x10] sm:$0xff]
  %v38 = vld [vmem:[%s2 + $0x18] sm:$0xff]
  %v39 = vld [vmem:[%s2 + $0x20] sm:$0xff]
  %v40 = vld [vmem:[%s2 + $0x28] sm:$0xff]
  %v41 = vld [vmem:[%s2 + $0x30] sm:$0xff]
  %v42 = vld [vmem:[%s2 + $0x38] sm:$0xff]
  %v43 = vld [vmem:[%s2 + $0x40] sm:$0xff]
  %v44 = vld [vmem:[%s2 + $0x48] sm:$0xff]
  %v45 = vld [vmem:[%s2 + $0x50] sm:$0xff]
  %v46 = vld [vmem:[%s2 + $0x58] sm:$0xff]
  %v47 = vld [vmem:[%s2 + $0x60] sm:$0xff]
  %v48 = vld [vmem:[%s2 + $0x68] sm:$0xff]
  %v49 = vld [vmem:[%s2 + $0x70] sm:$0xff]
  %v50 = vld [vmem:[%s2 + $0x78] sm:$0xff]
  %v51 = vld [vmem:[%s0] sm:$0xf]
  %v52 = vld [vmem:[%s0 + $0x4] sm:$0xf]
  %v53 = vld [vmem:[%s0 + $0x8] sm:$0xf]
  %v54 = vld [vmem:[%s0 + $0xc] sm:$0xf]
  %v55 = vld [vmem:[%s0 + $0x10] sm:$0xf]
  %v56 = vld [vmem:[%s0 + $0x14] sm:$0xf]
  %v57 = vld [vmem:[%s0 + $0x18] sm:$0xf]
  %v58 = vld [vmem:[%s0 + $0x1c] sm:$0xf]
  %v59 = vld [vmem:[%s0 + $0x20] sm:$0xf]
  %v60 = vld [vmem:[%s0 + $0x24] sm:$0xf]
  %v61 = vld [vmem:[%s0 + $0x28] sm:$0xf]
  %v62 = vld [vmem:[%s0 + $0x2c] sm:$0xf]
  %v63 = vld [vmem:[%s0 + $0x30] sm:$0xf]
  %v64 = vld [vmem:[%s0 + $0x34] sm:$0xf]
  %v65 = vld [vmem:[%s0 + $0x38] sm:$0xf]
  %v66 = vld [vmem:[%s0 + $0x3c] sm:$0xf]
  %s67 = sshra.s32 %s34, 3
  %s68 = sand.u32 %s34, 7
  %s69 = smul.addr %s67, 4
  %s70 = scalar_lea.vmem %s1, %s69
  %v71 = vld [vmem:[%s70] sm:$0xf]
  %v72 = vld [vmem:[%s70 + $0x4] sm:$0xf]
  %v73 = vld [vmem:[%s70 + $0x8] sm:$0xf]
  %v74 = vld [vmem:[%s70 + $0xc] sm:$0xf]
  %v75 = vld [vmem:[%s70 + $0x10] sm:$0xf]
  %v76 = vld [vmem:[%s70 + $0x14] sm:$0xf]
  %v77 = vld [vmem:[%s70 + $0x18] sm:$0xf]
  %v78 = vld [vmem:[%s70 + $0x1c] sm:$0xf]
  %v79 = vld [vmem:[%s70 + $0x20] sm:$0xf]
  %v80 = vld [vmem:[%s70 + $0x24] sm:$0xf]
  %v81 = vld [vmem:[%s70 + $0x28] sm:$0xf]
  %v82 = vld [vmem:[%s70 + $0x2c] sm:$0xf]
  %v83 = vld [vmem:[%s70 + $0x30] sm:$0xf]
  %v84 = vld [vmem:[%s70 + $0x34] sm:$0xf]
  %v85 = vld [vmem:[%s70 + $0x38] sm:$0xf]
  %v86 = vld [vmem:[%s70 + $0x3c] sm:$0xf]
  %v103 = vunpack.c.l.b16 %v51
  %v104 = vunpack.c.l.b16 %v52
  %v105 = vunpack.c.l.b16 %v53
  %v106 = vunpack.c.l.b16 %v54
  %v107 = vunpack.c.l.b16 %v55
  %v108 = vunpack.c.l.b16 %v56
  %v109 = vunpack.c.l.b16 %v57
  %v110 = vunpack.c.l.b16 %v58
  %v111 = vunpack.c.l.b16 %v59
  %v112 = vunpack.c.l.b16 %v60
  %v113 = vunpack.c.l.b16 %v61
  %v114 = vunpack.c.l.b16 %v62
  %v115 = vunpack.c.l.b16 %v63
  %v116 = vunpack.c.l.b16 %v64
  %v117 = vunpack.c.l.b16 %v65
  %v118 = vunpack.c.l.b16 %v66
  %v119 = vpack.c.b16 %v104, %v103
  %v120 = vpack.c.b16 %v106, %v105
  %v121 = vpack.c.b16 %v108, %v107
  %v122 = vpack.c.b16 %v110, %v109
  %v123 = vpack.c.b16 %v112, %v111
  %v124 = vpack.c.b16 %v114, %v113
  %v125 = vpack.c.b16 %v116, %v115
  %v126 = vpack.c.b16 %v118, %v117
  %v151 = vunpack.c.l.b16 %v71
  %v152 = vunpack.c.l.b16 %v72
  %v153 = vunpack.c.l.b16 %v73
  %v154 = vunpack.c.l.b16 %v74
  %v155 = vunpack.c.l.b16 %v75
  %v156 = vunpack.c.l.b16 %v76
  %v157 = vunpack.c.l.b16 %v77
  %v158 = vunpack.c.l.b16 %v78
  %v159 = vunpack.c.l.b16 %v79
  %v160 = vunpack.c.l.b16 %v80
  %v161 = vunpack.c.l.b16 %v81
  %v162 = vunpack.c.l.b16 %v82
  %v163 = vunpack.c.l.b16 %v83
  %v164 = vunpack.c.l.b16 %v84
  %v165 = vunpack.c.l.b16 %v85
  %v166 = vunpack.c.l.b16 %v86
  %v167 = vpack.c.b16 %v152, %v151
  %v168 = vpack.c.b16 %v154, %v153
  %v169 = vpack.c.b16 %v156, %v155
  %v170 = vpack.c.b16 %v158, %v157
  %v171 = vpack.c.b16 %v160, %v159
  %v172 = vpack.c.b16 %v162, %v161
  %v173 = vpack.c.b16 %v164, %v163
  %v174 = vpack.c.b16 %v166, %v165
  %183 = vmatprep.subr.bf16.mxu0 0
  %184 = vmatpush1.bf16.msra.mxu0 %v167
  %185 = vmatprep.subr.bf16.mxu0 0
  %186 = vmatpush1.bf16.msra.mxu0 %v168
  %187 = vmatprep.subr.bf16.mxu0 0
  %188 = vmatpush1.bf16.msra.mxu0 %v169
  %189 = vmatprep.subr.bf16.mxu0 0
  %190 = vmatpush1.bf16.msra.mxu0 %v170
  %191 = vmatprep.subr.bf16.mxu0 0
  %192 = vmatpush1.bf16.msra.mxu0 %v171
  %193 = vmatprep.subr.bf16.mxu0 0
  %194 = vmatpush1.bf16.msra.mxu0 %v172
  %195 = vmatprep.subr.bf16.mxu0 0
  %196 = vmatpush1.bf16.msra.mxu0 %v173
  %197 = vmatprep.subr.bf16.mxu0 0
  %198 = vmatpush1.bf16.msra.mxu0 %v174
  %199 = vmatprep.subr.bf16.mxu0 0
  %200 = vmatpush1.bf16.msra.mxu0 0
  %201 = vmatprep.subr.bf16.mxu0 0
  %202 = vmatpush1.bf16.msra.mxu0 0
  %203 = vmatprep.subr.bf16.mxu0 0
  %204 = vmatpush1.bf16.msra.mxu0 0
  %205 = vmatprep.subr.bf16.mxu0 0
  %206 = vmatpush1.bf16.msra.mxu0 0
  %207 = vmatprep.subr.bf16.mxu0 0
  %208 = vmatpush1.bf16.msra.mxu0 0
  %209 = vmatprep.subr.bf16.mxu0 0
  %210 = vmatpush1.bf16.msra.mxu0 0
  %211 = vmatprep.subr.bf16.mxu0 0
  %212 = vmatpush1.bf16.msra.mxu0 0
  %213 = vmatprep.subr.bf16.mxu0 0
  %214 = vmatpush1.bf16.msra.mxu0 0
  %215 = vmatprep.mubr.bf16.mxu0 0
  %216 = vmatmul.mubr.bf16.gmra.mrb[0].mxu0 %v119
  %v217 = vpop.f32.mrb[0].mxu0
  %v218 = vadd.f32 0.0, %v217
  %v219 = vpop.f32.mrb[0].mxu0
  %v220 = vpop.f32.mrb[0].mxu0
  %v221 = vadd.f32 0.0, %v220
  %v222 = vpop.f32.mrb[0].mxu0
  %223 = vmatprep.mubr.bf16.mxu0 0
  %224 = vmatmul.mubr.bf16.gmra.mrb[0].mxu0 %v120
  %v225 = vpop.f32.mrb[0].mxu0
  %v226 = vadd.f32 0.0, %v225
  %v227 = vpop.f32.mrb[0].mxu0
  %v228 = vpop.f32.mrb[0].mxu0
  %v229 = vadd.f32 0.0, %v228
  %v230 = vpop.f32.mrb[0].mxu0
  %231 = vmatprep.mubr.bf16.mxu0 0
  %232 = vmatmul.mubr.bf16.gmra.mrb[0].mxu0 %v121
  %v233 = vpop.f32.mrb[0].mxu0
  %v234 = vadd.f32 0.0, %v233
  %v235 = vpop.f32.mrb[0].mxu0
  %v236 = vpop.f32.mrb[0].mxu0
  %v237 = vadd.f32 0.0, %v236
  %v238 = vpop.f32.mrb[0].mxu0
  %239 = vmatprep.mubr.bf16.mxu0 0
  %240 = vmatmul.mubr.bf16.gmra.mrb[0].mxu0 %v122
  %v241 = vpop.f32.mrb[0].mxu0
  %v242 = vadd.f32 0.0, %v241
  %v243 = vpop.f32.mrb[0].mxu0
  %v244 = vpop.f32.mrb[0].mxu0
  %v245 = vadd.f32 0.0, %v244
  %v246 = vpop.f32.mrb[0].mxu0
  %247 = vmatprep.mubr.bf16.mxu0 0
  %248 = vmatmul.mubr.bf16.gmra.mrb[0].mxu0 %v123
  %v249 = vpop.f32.mrb[0].mxu0
  %v250 = vadd.f32 0.0, %v249
  %v251 = vpop.f32.mrb[0].mxu0
  %v252 = vpop.f32.mrb[0].mxu0
  %v253 = vadd.f32 0.0, %v252
  %v254 = vpop.f32.mrb[0].mxu0
  %255 = vmatprep.mubr.bf16.mxu0 0
  %256 = vmatmul.mubr.bf16.gmra.mrb[0].mxu0 %v124
  %v257 = vpop.f32.mrb[0].mxu0
  %v258 = vadd.f32 0.0, %v257
  %v259 = vpop.f32.mrb[0].mxu0
  %v260 = vpop.f32.mrb[0].mxu0
  %v261 = vadd.f32 0.0, %v260
  %v262 = vpop.f32.mrb[0].mxu0
  %263 = vmatprep.mubr.bf16.mxu0 0
  %264 = vmatmul.mubr.bf16.gmra.mrb[0].mxu0 %v125
  %v265 = vpop.f32.mrb[0].mxu0
  %v266 = vadd.f32 0.0, %v265
  %v267 = vpop.f32.mrb[0].mxu0
  %v268 = vpop.f32.mrb[0].mxu0
  %v269 = vadd.f32 0.0, %v268
  %v270 = vpop.f32.mrb[0].mxu0
  %271 = vmatprep.mubr.bf16.mxu0 0
  %272 = vmatmul.mubr.bf16.gmra.mrb[0].mxu0 %v126
  %v273 = vpop.f32.mrb[0].mxu0
  %v274 = vadd.f32 0.0, %v273
  %v275 = vpop.f32.mrb[0].mxu0
  %v276 = vpop.f32.mrb[0].mxu0
  %v277 = vadd.f32 0.0, %v276
  %v278 = vpop.f32.mrb[0].mxu0
  %279 = vdwg.mxu0
  %v280 = vadd.f32 %v35, %v218
  %v281 = vadd.f32 %v36, %v221
  %v282 = vadd.f32 %v37, %v226
  %v283 = vadd.f32 %v38, %v229
  %v284 = vadd.f32 %v39, %v234
  %v285 = vadd.f32 %v40, %v237
  %v286 = vadd.f32 %v41, %v242
  %v287 = vadd.f32 %v42, %v245
  %v288 = vadd.f32 %v43, %v250
  %v289 = vadd.f32 %v44, %v253
  %v290 = vadd.f32 %v45, %v258
  %v291 = vadd.f32 %v46, %v261
  %v292 = vadd.f32 %v47, %v266
  %v293 = vadd.f32 %v48, %v269
  %v294 = vadd.f32 %v49, %v274
  %v295 = vadd.f32 %v50, %v277
  %296 = vst [vmem:[%s2] sm:$0xff] %v280
  %297 = vst [vmem:[%s2 + $0x8] sm:$0xff] %v281
  %298 = vst [vmem:[%s2 + $0x10] sm:$0xff] %v282
  %299 = vst [vmem:[%s2 + $0x18] sm:$0xff] %v283
  %300 = vst [vmem:[%s2 + $0x20] sm:$0xff] %v284
  %301 = vst [vmem:[%s2 + $0x28] sm:$0xff] %v285
  %302 = vst [vmem:[%s2 + $0x30] sm:$0xff] %v286
  %303 = vst [vmem:[%s2 + $0x38] sm:$0xff] %v287
  %304 = vst [vmem:[%s2 + $0x40] sm:$0xff] %v288
  %305 = vst [vmem:[%s2 + $0x48] sm:$0xff] %v289
  %306 = vst [vmem:[%s2 + $0x50] sm:$0xff] %v290
  %307 = vst [vmem:[%s2 + $0x58] sm:$0xff] %v291
  %308 = vst [vmem:[%s2 + $0x60] sm:$0xff] %v292
  %309 = vst [vmem:[%s2 + $0x68] sm:$0xff] %v293
  %310 = vst [vmem:[%s2 + $0x70] sm:$0xff] %v294
  %311 = vst [vmem:[%s2 + $0x78] sm:$0xff] %v295
  // Predicated region
  $region14: #{sgl_forward.3} parent=0 // pred_check
    %p312 = pneg %p14
  $region15: #{sgl_forward.3} parent=0 // pred_check_branch
    %314 = sbr.rel (%p312) target = $region17
  $region16: #{sgl_forward.3} parent=0 // pred_region
    %v315 = vld [vmem:[%s2] sm:$0xff]
    %v316 = vld [vmem:[%s2 + $0x8] sm:$0xff]
    %v317 = vld [vmem:[%s2 + $0x10] sm:$0xff]
    %v318 = vld [vmem:[%s2 + $0x18] sm:$0xff]
    %v319 = vld [vmem:[%s2 + $0x20] sm:$0xff]
    %v320 = vld [vmem:[%s2 + $0x28] sm:$0xff]
    %v321 = vld [vmem:[%s2 + $0x30] sm:$0xff]
    %v322 = vld [vmem:[%s2 + $0x38] sm:$0xff]
    %v323 = vld [vmem:[%s2 + $0x40] sm:$0xff]
    %v324 = vld [vmem:[%s2 + $0x48] sm:$0xff]
    %v325 = vld [vmem:[%s2 + $0x50] sm:$0xff]
    %v326 = vld [vmem:[%s2 + $0x58] sm:$0xff]
    %v327 = vld [vmem:[%s2 + $0x60] sm:$0xff]
    %v328 = vld [vmem:[%s2 + $0x68] sm:$0xff]
    %v329 = vld [vmem:[%s2 + $0x70] sm:$0xff]
    %v330 = vld [vmem:[%s2 + $0x78] sm:$0xff]
    %v331 = vpack.c.bf16 %v316, %v315
    %v332 = vpack.c.bf16 %v318, %v317
    %v333 = vpack.c.bf16 %v320, %v319
    %v334 = vpack.c.bf16 %v322, %v321
    %v335 = vpack.c.bf16 %v324, %v323
    %v336 = vpack.c.bf16 %v326, %v325
    %v337 = vpack.c.bf16 %v328, %v327
    %v338 = vpack.c.bf16 %v330, %v329
    %v347 = vunpack.c.l.b16 %v331
    %v348 = vunpack.c.h.b16 %v331
    %v349 = vunpack.c.l.b16 %v332
    %v350 = vunpack.c.h.b16 %v332
    %v351 = vunpack.c.l.b16 %v333
    %v352 = vunpack.c.h.b16 %v333
    %v353 = vunpack.c.l.b16 %v334
    %v354 = vunpack.c.h.b16 %v334
    %v355 = vunpack.c.l.b16 %v335
    %v356 = vunpack.c.h.b16 %v335
    %v357 = vunpack.c.l.b16 %v336
    %v358 = vunpack.c.h.b16 %v336
    %v359 = vunpack.c.l.b16 %v337
    %v360 = vunpack.c.h.b16 %v337
    %v361 = vunpack.c.l.b16 %v338
    %v362 = vunpack.c.h.b16 %v338
    %v363 = vpack.c.b16 %v347, %v347
    %v364 = vpack.c.b16 %v348, %v348
    %v365 = vpack.c.b16 %v349, %v349
    %v366 = vpack.c.b16 %v350, %v350
    %v367 = vpack.c.b16 %v351, %v351
    %v368 = vpack.c.b16 %v352, %v352
    %v369 = vpack.c.b16 %v353, %v353
    %v370 = vpack.c.b16 %v354, %v354
    %v371 = vpack.c.b16 %v355, %v355
    %v372 = vpack.c.b16 %v356, %v356
    %v373 = vpack.c.b16 %v357, %v357
    %v374 = vpack.c.b16 %v358, %v358
    %v375 = vpack.c.b16 %v359, %v359
    %v376 = vpack.c.b16 %v360, %v360
    %v377 = vpack.c.b16 %v361, %v361
    %v378 = vpack.c.b16 %v362, %v362
    %395 = vst [vmem:[%s3] sm:$0xf] %v363
    %396 = vst [vmem:[%s3 + $0x4] sm:$0xf] %v364
    %397 = vst [vmem:[%s3 + $0x8] sm:$0xf] %v365
    %398 = vst [vmem:[%s3 + $0xc] sm:$0xf] %v366
    %399 = vst [vmem:[%s3 + $0x10] sm:$0xf] %v367
    %400 = vst [vmem:[%s3 + $0x14] sm:$0xf] %v368
    %401 = vst [vmem:[%s3 + $0x18] sm:$0xf] %v369
    %402 = vst [vmem:[%s3 + $0x1c] sm:$0xf] %v370
    %403 = vst [vmem:[%s3 + $0x20] sm:$0xf] %v371
    %404 = vst [vmem:[%s3 + $0x24] sm:$0xf] %v372
    %405 = vst [vmem:[%s3 + $0x28] sm:$0xf] %v373
    %406 = vst [vmem:[%s3 + $0x2c] sm:$0xf] %v374
    %407 = vst [vmem:[%s3 + $0x30] sm:$0xf] %v375
    %408 = vst [vmem:[%s3 + $0x34] sm:$0xf] %v376
    %409 = vst [vmem:[%s3 + $0x38] sm:$0xf] %v377
    %410 = vst [vmem:[%s3 + $0x3c] sm:$0xf] %v378
  $region17: #{sgl_forward.3} parent=0 // pred_fallthru
    _
  // Predicated region
  $region18: #{sgl_forward.3} parent=0 // pred_check
    _
  $region19: #{sgl_forward.3} parent=0 // pred_check_branch
    %412 = sbr.rel (0) target = $region21
  $region20: #{sgl_forward.3} parent=0 // pred_region
    _
  $region21: #{sgl_forward.3} parent=0 // pred_fallthru
    _
  // Predicated region
  $region22: #{sgl_forward.3} parent=0 // pred_check
    _
  $region23: #{sgl_forward.3} parent=0 // pred_check_branch
    %414 = sbr.rel (0) target = $region25
  $region24: #{sgl_forward.3} parent=0 // pred_region
    _
  $region25: #{sgl_forward.3} parent=0 // pred_fallthru
    _
  // Predicated region
  $region26: #{sgl_forward.3} parent=0 // pred_check
    _
  $region27: #{sgl_forward.3} parent=0 // pred_check_branch
    %416 = sbr.rel (0) target = $region29
  $region28: #{sgl_forward.3} parent=0 // pred_region
    _
  $region29: #{sgl_forward.3} parent=0 // pred_fallthru
    _
  // Predicated region
  $region30: #{sgl_forward.3} parent=0 // pred_check
    _
  $region31: #{sgl_forward.3} parent=0 // pred_check_branch
    %418 = sbr.rel (0) target = $region33
  $region32: #{sgl_forward.3} parent=0 // pred_region
    _
  $region33: #{sgl_forward.3} parent=0 // pred_fallthru
    _

// kernel: sgl_forward.4
$region0: #{sgl_forward.4}
  #allocation0 [shape = 'u32[]', space=smem, size = 0x4, offset = 0x4, fixed_abs, tag = 'smem constant byte address 0x4 - core index']
  #allocation1 [shape = 'u32[144,128]{1,0:T(1,128)}', space=vmem, size = 0x12000, scoped, tag = 'internal scratch']
  %s0 = inlined_call_operand.vmem [shape: bf16[128,128], index: 0, kind: input, shape index: {}]
  %s1 = inlined_call_operand.vmem [shape: bf16[128,128], index: 1, kind: input, shape index: {}]
  %s2 = inlined_call_operand.vmem [shape: f32[128,128], index: 2, kind: output, shape index: {0}]
  %s3 = inlined_call_operand.hbm [shape: bf16[128,128], index: 3, kind: output, shape index: {1}]
  %4 = xla_tuple %s2, %s3
  %s5 = sld [smem:[#allocation0]]
  $region34: #{sgl_forward.4} parent=0
    _
  %s7 = ssub.s32 1, %s5
  %s8 = scalar_select 0, %s7, %s5
  $region1: #{sgl_forward.4} parent=0
    #allocation2 [shape = 'u8[32768]{0}', space=vmem, size = 0x8000, scoped, tag = 'output window, operand 1, single buffered']
    #allocation3 [shape = 's32[1]{0}', space=sflag, size = 0x4, scoped, tag = 'scoped memory for sgl_forward.4']
    %9 = vsyncpa [#allocation3], 0
    // Predicated region
    $region2: #{sgl_forward.4} parent=1 // pred_check
      _
    $region3: #{sgl_forward.4} parent=1 // pred_check_branch
      %11 = sbr.rel (0) target = $region5
    $region4: #{sgl_forward.4} parent=1 // pred_region
      _
    $region5: #{sgl_forward.4} parent=1 // pred_fallthru
      _
    // Predicated region
    $region6: #{sgl_forward.4} parent=1 // pred_check
      _
    $region7: #{sgl_forward.4} parent=1 // pred_check_branch
      %13 = sbr.rel (0) target = $region9
    $region8: #{sgl_forward.4} parent=1 // pred_region
      _
    $region9: #{sgl_forward.4} parent=1 // pred_fallthru
      _
    %p15 = scmp.eq.s32.totalorder 0, 0
    // Predicated region
    $region10: #{sgl_forward.4} parent=1 // pred_check
      %p16 = pneg %p15
    $region11: #{sgl_forward.4} parent=1 // pred_check_branch
      %18 = sbr.rel (%p16) target = $region13
    $region12: #{sgl_forward.4} parent=1 // pred_region
      %19 = vst [vmem:[%s2] sm:$0xff] 0.0
      %20 = vst [vmem:[%s2 + $0x8] sm:$0xff] 0.0
      %21 = vst [vmem:[%s2 + $0x10] sm:$0xff] 0.0
      %22 = vst [vmem:[%s2 + $0x18] sm:$0xff] 0.0
      %23 = vst [vmem:[%s2 + $0x20] sm:$0xff] 0.0
      %24 = vst [vmem:[%s2 + $0x28] sm:$0xff] 0.0
      %25 = vst [vmem:[%s2 + $0x30] sm:$0xff] 0.0
      %26 = vst [vmem:[%s2 + $0x38] sm:$0xff] 0.0
      %27 = vst [vmem:[%s2 + $0x40] sm:$0xff] 0.0
      %28 = vst [vmem:[%s2 + $0x48] sm:$0xff] 0.0
      %29 = vst [vmem:[%s2 + $0x50] sm:$0xff] 0.0
      %30 = vst [vmem:[%s2 + $0x58] sm:$0xff] 0.0
      %31 = vst [vmem:[%s2 + $0x60] sm:$0xff] 0.0
      %32 = vst [vmem:[%s2 + $0x68] sm:$0xff] 0.0
      %33 = vst [vmem:[%s2 + $0x70] sm:$0xff] 0.0
      %34 = vst [vmem:[%s2 + $0x78] sm:$0xff] 0.0
    $region13: #{sgl_forward.4} parent=1 // pred_fallthru
      _
    %s35 = smul.u32 0, 128
    %v36 = vld [vmem:[%s2] sm:$0xff]
    %v37 = vld [vmem:[%s2 + $0x8] sm:$0xff]
    %v38 = vld [vmem:[%s2 + $0x10] sm:$0xff]
    %v39 = vld [vmem:[%s2 + $0x18] sm:$0xff]
    %v40 = vld [vmem:[%s2 + $0x20] sm:$0xff]
    %v41 = vld [vmem:[%s2 + $0x28] sm:$0xff]
    %v42 = vld [vmem:[%s2 + $0x30] sm:$0xff]
    %v43 = vld [vmem:[%s2 + $0x38] sm:$0xff]
    %v44 = vld [vmem:[%s2 + $0x40] sm:$0xff]
    %v45 = vld [vmem:[%s2 + $0x48] sm:$0xff]
    %v46 = vld [vmem:[%s2 + $0x50] sm:$0xff]
    %v47 = vld [vmem:[%s2 + $0x58] sm:$0xff]
    %v48 = vld [vmem:[%s2 + $0x60] sm:$0xff]
    %v49 = vld [vmem:[%s2 + $0x68] sm:$0xff]
    %v50 = vld [vmem:[%s2 + $0x70] sm:$0xff]
    %v51 = vld [vmem:[%s2 + $0x78] sm:$0xff]
    %v52 = vld [vmem:[%s0] sm:$0xf]
    %v53 = vld [vmem:[%s0 + $0x4] sm:$0xf]
    %v54 = vld [vmem:[%s0 + $0x8] sm:$0xf]
    %v55 = vld [vmem:[%s0 + $0xc] sm:$0xf]
    %v56 = vld [vmem:[%s0 + $0x10] sm:$0xf]
    %v57 = vld [vmem:[%s0 + $0x14] sm:$0xf]
    %v58 = vld [vmem:[%s0 + $0x18] sm:$0xf]
    %v59 = vld [vmem:[%s0 + $0x1c] sm:$0xf]
    %v60 = vld [vmem:[%s0 + $0x20] sm:$0xf]
    %v61 = vld [vmem:[%s0 + $0x24] sm:$0xf]
    %v62 = vld [vmem:[%s0 + $0x28] sm:$0xf]
    %v63 = vld [vmem:[%s0 + $0x2c] sm:$0xf]
    %v64 = vld [vmem:[%s0 + $0x30] sm:$0xf]
    %v65 = vld [vmem:[%s0 + $0x34] sm:$0xf]
    %v66 = vld [vmem:[%s0 + $0x38] sm:$0xf]
    %v67 = vld [vmem:[%s0 + $0x3c] sm:$0xf]
    %s68 = sshra.s32 %s35, 3
    %s69 = sand.u32 %s35, 7
    %s70 = smul.addr %s68, 4
    %s71 = scalar_lea.vmem %s1, %s70
    %v72 = vld [vmem:[%s71] sm:$0xf]
    %v73 = vld [vmem:[%s71 + $0x4] sm:$0xf]
    %v74 = vld [vmem:[%s71 + $0x8] sm:$0xf]
    %v75 = vld [vmem:[%s71 + $0xc] sm:$0xf]
    %v76 = vld [vmem:[%s71 + $0x10] sm:$0xf]
    %v77 = vld [vmem:[%s71 + $0x14] sm:$0xf]
    %v78 = vld [vmem:[%s71 + $0x18] sm:$0xf]
    %v79 = vld [vmem:[%s71 + $0x1c] sm:$0xf]
    %v80 = vld [vmem:[%s71 + $0x20] sm:$0xf]
    %v81 = vld [vmem:[%s71 + $0x24] sm:$0xf]
    %v82 = vld [vmem:[%s71 + $0x28] sm:$0xf]
    %v83 = vld [vmem:[%s71 + $0x2c] sm:$0xf]
    %v84 = vld [vmem:[%s71 + $0x30] sm:$0xf]
    %v85 = vld [vmem:[%s71 + $0x34] sm:$0xf]
    %v86 = vld [vmem:[%s71 + $0x38] sm:$0xf]
    %v87 = vld [vmem:[%s71 + $0x3c] sm:$0xf]
    %v104 = vunpack.c.l.b16 %v52
    %v105 = vunpack.c.l.b16 %v53
    %v106 = vunpack.c.l.b16 %v54
    %v107 = vunpack.c.l.b16 %v55
    %v108 = vunpack.c.l.b16 %v56
    %v109 = vunpack.c.l.b16 %v57
    %v110 = vunpack.c.l.b16 %v58
    %v111 = vunpack.c.l.b16 %v59
    %v112 = vunpack.c.l.b16 %v60
    %v113 = vunpack.c.l.b16 %v61
    %v114 = vunpack.c.l.b16 %v62
    %v115 = vunpack.c.l.b16 %v63
    %v116 = vunpack.c.l.b16 %v64
    %v117 = vunpack.c.l.b16 %v65
    %v118 = vunpack.c.l.b16 %v66
    %v119 = vunpack.c.l.b16 %v67
    %v120 = vpack.c.b16 %v105, %v104
    %v121 = vpack.c.b16 %v107, %v106
    %v122 = vpack.c.b16 %v109, %v108
    %v123 = vpack.c.b16 %v111, %v110
    %v124 = vpack.c.b16 %v113, %v112
    %v125 = vpack.c.b16 %v115, %v114
    %v126 = vpack.c.b16 %v117, %v116
    %v127 = vpack.c.b16 %v119, %v118
    %v152 = vunpack.c.l.b16 %v72
    %v153 = vunpack.c.l.b16 %v73
    %v154 = vunpack.c.l.b16 %v74
    %v155 = vunpack.c.l.b16 %v75
    %v156 = vunpack.c.l.b16 %v76
    %v157 = vunpack.c.l.b16 %v77
    %v158 = vunpack.c.l.b16 %v78
    %v159 = vunpack.c.l.b16 %v79
    %v160 = vunpack.c.l.b16 %v80
    %v161 = vunpack.c.l.b16 %v81
    %v162 = vunpack.c.l.b16 %v82
    %v163 = vunpack.c.l.b16 %v83
    %v164 = vunpack.c.l.b16 %v84
    %v165 = vunpack.c.l.b16 %v85
    %v166 = vunpack.c.l.b16 %v86
    %v167 = vunpack.c.l.b16 %v87
    %v168 = vpack.c.b16 %v153, %v152
    %v169 = vpack.c.b16 %v155, %v154
    %v170 = vpack.c.b16 %v157, %v156
    %v171 = vpack.c.b16 %v159, %v158
    %v172 = vpack.c.b16 %v161, %v160
    %v173 = vpack.c.b16 %v163, %v162
    %v174 = vpack.c.b16 %v165, %v164
    %v175 = vpack.c.b16 %v167, %v166
    %184 = vmatprep.subr.bf16.mxu0 0
    %185 = vmatpush1.bf16.msra.mxu0 %v168
    %186 = vmatprep.subr.bf16.mxu0 0
    %187 = vmatpush1.bf16.msra.mxu0 %v169
    %188 = vmatprep.subr.bf16.mxu0 0
    %189 = vmatpush1.bf16.msra.mxu0 %v170
    %190 = vmatprep.subr.bf16.mxu0 0
    %191 = vmatpush1.bf16.msra.mxu0 %v171
    %192 = vmatprep.subr.bf16.mxu0 0
    %193 = vmatpush1.bf16.msra.mxu0 %v172
    %194 = vmatprep.subr.bf16.mxu0 0
    %195 = vmatpush1.bf16.msra.mxu0 %v173
    %196 = vmatprep.subr.bf16.mxu0 0
    %197 = vmatpush1.bf16.msra.mxu0 %v174
    %198 = vmatprep.subr.bf16.mxu0 0
    %199 = vmatpush1.bf16.msra.mxu0 %v175
    %200 = vmatprep.subr.bf16.mxu0 0
    %201 = vmatpush1.bf16.msra.mxu0 0
    %202 = vmatprep.subr.bf16.mxu0 0
    %203 = vmatpush1.bf16.msra.mxu0 0
    %204 = vmatprep.subr.bf16.mxu0 0
    %205 = vmatpush1.bf16.msra.mxu0 0
    %206 = vmatprep.subr.bf16.mxu0 0
    %207 = vmatpush1.bf16.msra.mxu0 0
    %208 = vmatprep.subr.bf16.mxu0 0
    %209 = vmatpush1.bf16.msra.mxu0 0
    %210 = vmatprep.subr.bf16.mxu0 0
    %211 = vmatpush1.bf16.msra.mxu0 0
    %212 = vmatprep.subr.bf16.mxu0 0
    %213 = vmatpush1.bf16.msra.mxu0 0
    %214 = vmatprep.subr.bf16.mxu0 0
    %215 = vmatpush1.bf16.msra.mxu0 0
    %216 = vmatprep.mubr.bf16.mxu0 0
    %217 = vmatmul.mubr.bf16.gmra.mrb[0].mxu0 %v120
    %v218 = vpop.f32.mrb[0].mxu0
    %v219 = vadd.f32 0.0, %v218
    %v220 = vpop.f32.mrb[0].mxu0
    %v221 = vpop.f32.mrb[0].mxu0
    %v222 = vadd.f32 0.0, %v221
    %v223 = vpop.f32.mrb[0].mxu0
    %224 = vmatprep.mubr.bf16.mxu0 0
    %225 = vmatmul.mubr.bf16.gmra.mrb[0].mxu0 %v121
    %v226 = vpop.f32.mrb[0].mxu0
    %v227 = vadd.f32 0.0, %v226
    %v228 = vpop.f32.mrb[0].mxu0
    %v229 = vpop.f32.mrb[0].mxu0
    %v230 = vadd.f32 0.0, %v229
    %v231 = vpop.f32.mrb[0].mxu0
    %232 = vmatprep.mubr.bf16.mxu0 0
    %233 = vmatmul.mubr.bf16.gmra.mrb[0].mxu0 %v122
    %v234 = vpop.f32.mrb[0].mxu0
    %v235 = vadd.f32 0.0, %v234
    %v236 = vpop.f32.mrb[0].mxu0
    %v237 = vpop.f32.mrb[0].mxu0
    %v238 = vadd.f32 0.0, %v237
    %v239 = vpop.f32.mrb[0].mxu0
    %240 = vmatprep.mubr.bf16.mxu0 0
    %241 = vmatmul.mubr.bf16.gmra.mrb[0].mxu0 %v123
    %v242 = vpop.f32.mrb[0].mxu0
    %v243 = vadd.f32 0.0, %v242
    %v244 = vpop.f32.mrb[0].mxu0
    %v245 = vpop.f32.mrb[0].mxu0
    %v246 = vadd.f32 0.0, %v245
    %v247 = vpop.f32.mrb[0].mxu0
    %248 = vmatprep.mubr.bf16.mxu0 0
    %249 = vmatmul.mubr.bf16.gmra.mrb[0].mxu0 %v124
    %v250 = vpop.f32.mrb[0].mxu0
    %v251 = vadd.f32 0.0, %v250
    %v252 = vpop.f32.mrb[0].mxu0
    %v253 = vpop.f32.mrb[0].mxu0
    %v254 = vadd.f32 0.0, %v253
    %v255 = vpop.f32.mrb[0].mxu0
    %256 = vmatprep.mubr.bf16.mxu0 0
    %257 = vmatmul.mubr.bf16.gmra.mrb[0].mxu0 %v125
    %v258 = vpop.f32.mrb[0].mxu0
    %v259 = vadd.f32 0.0, %v258
    %v260 = vpop.f32.mrb[0].mxu0
    %v261 = vpop.f32.mrb[0].mxu0
    %v262 = vadd.f32 0.0, %v261
    %v263 = vpop.f32.mrb[0].mxu0
    %264 = vmatprep.mubr.bf16.mxu0 0
    %265 = vmatmul.mubr.bf16.gmra.mrb[0].mxu0 %v126
    %v266 = vpop.f32.mrb[0].mxu0
    %v267 = vadd.f32 0.0, %v266
    %v268 = vpop.f32.mrb[0].mxu0
    %v269 = vpop.f32.mrb[0].mxu0
    %v270 = vadd.f32 0.0, %v269
    %v271 = vpop.f32.mrb[0].mxu0
    %272 = vmatprep.mubr.bf16.mxu0 0
    %273 = vmatmul.mubr.bf16.gmra.mrb[0].mxu0 %v127
    %v274 = vpop.f32.mrb[0].mxu0
    %v275 = vadd.f32 0.0, %v274
    %v276 = vpop.f32.mrb[0].mxu0
    %v277 = vpop.f32.mrb[0].mxu0
    %v278 = vadd.f32 0.0, %v277
    %v279 = vpop.f32.mrb[0].mxu0
    %280 = vdwg.mxu0
    %v281 = vadd.f32 %v36, %v219
    %v282 = vadd.f32 %v37, %v222
    %v283 = vadd.f32 %v38, %v227
    %v284 = vadd.f32 %v39, %v230
    %v285 = vadd.f32 %v40, %v235
    %v286 = vadd.f32 %v41, %v238
    %v287 = vadd.f32 %v42, %v243
    %v288 = vadd.f32 %v43, %v246
    %v289 = vadd.f32 %v44, %v251
    %v290 = vadd.f32 %v45, %v254
    %v291 = vadd.f32 %v46, %v259
    %v292 = vadd.f32 %v47, %v262
    %v293 = vadd.f32 %v48, %v267
    %v294 = vadd.f32 %v49, %v270
    %v295 = vadd.f32 %v50, %v275
    %v296 = vadd.f32 %v51, %v278
    %297 = vst [vmem:[%s2] sm:$0xff] %v281
    %298 = vst [vmem:[%s2 + $0x8] sm:$0xff] %v282
    %299 = vst [vmem:[%s2 + $0x10] sm:$0xff] %v283
    %300 = vst [vmem:[%s2 + $0x18] sm:$0xff] %v284
    %301 = vst [vmem:[%s2 + $0x20] sm:$0xff] %v285
    %302 = vst [vmem:[%s2 + $0x28] sm:$0xff] %v286
    %303 = vst [vmem:[%s2 + $0x30] sm:$0xff] %v287
    %304 = vst [vmem:[%s2 + $0x38] sm:$0xff] %v288
    %305 = vst [vmem:[%s2 + $0x40] sm:$0xff] %v289
    %306 = vst [vmem:[%s2 + $0x48] sm:$0xff] %v290
    %307 = vst [vmem:[%s2 + $0x50] sm:$0xff] %v291
    %308 = vst [vmem:[%s2 + $0x58] sm:$0xff] %v292
    %309 = vst [vmem:[%s2 + $0x60] sm:$0xff] %v293
    %310 = vst [vmem:[%s2 + $0x68] sm:$0xff] %v294
    %311 = vst [vmem:[%s2 + $0x70] sm:$0xff] %v295
    %312 = vst [vmem:[%s2 + $0x78] sm:$0xff] %v296
    // Predicated region
    $region14: #{sgl_forward.4} parent=1 // pred_check
      %p313 = pneg %p15
    $region15: #{sgl_forward.4} parent=1 // pred_check_branch
      %315 = sbr.rel (%p313) target = $region17
    $region16: #{sgl_forward.4} parent=1 // pred_region
      %v316 = vld [vmem:[%s2] sm:$0xff]
      %v317 = vld [vmem:[%s2 + $0x8] sm:$0xff]
      %v318 = vld [vmem:[%s2 + $0x10] sm:$0xff]
      %v319 = vld [vmem:[%s2 + $0x18] sm:$0xff]
      %v320 = vld [vmem:[%s2 + $0x20] sm:$0xff]
      %v321 = vld [vmem:[%s2 + $0x28] sm:$0xff]
      %v322 = vld [vmem:[%s2 + $0x30] sm:$0xff]
      %v323 = vld [vmem:[%s2 + $0x38] sm:$0xff]
      %v324 = vld [vmem:[%s2 + $0x40] sm:$0xff]
      %v325 = vld [vmem:[%s2 + $0x48] sm:$0xff]
      %v326 = vld [vmem:[%s2 + $0x50] sm:$0xff]
      %v327 = vld [vmem:[%s2 + $0x58] sm:$0xff]
      %v328 = vld [vmem:[%s2 + $0x60] sm:$0xff]
      %v329 = vld [vmem:[%s2 + $0x68] sm:$0xff]
      %v330 = vld [vmem:[%s2 + $0x70] sm:$0xff]
      %v331 = vld [vmem:[%s2 + $0x78] sm:$0xff]
      %v332 = vpack.c.bf16 %v317, %v316
      %v333 = vpack.c.bf16 %v319, %v318
      %v334 = vpack.c.bf16 %v321, %v320
      %v335 = vpack.c.bf16 %v323, %v322
      %v336 = vpack.c.bf16 %v325, %v324
      %v337 = vpack.c.bf16 %v327, %v326
      %v338 = vpack.c.bf16 %v329, %v328
      %v339 = vpack.c.bf16 %v331, %v330
      %v348 = vunpack.c.l.b16 %v332
      %v349 = vunpack.c.h.b16 %v332
      %v350 = vunpack.c.l.b16 %v333
      %v351 = vunpack.c.h.b16 %v333
      %v352 = vunpack.c.l.b16 %v334
      %v353 = vunpack.c.h.b16 %v334
      %v354 = vunpack.c.l.b16 %v335
      %v355 = vunpack.c.h.b16 %v335
      %v356 = vunpack.c.l.b16 %v336
      %v357 = vunpack.c.h.b16 %v336
      %v358 = vunpack.c.l.b16 %v337
      %v359 = vunpack.c.h.b16 %v337
      %v360 = vunpack.c.l.b16 %v338
      %v361 = vunpack.c.h.b16 %v338
      %v362 = vunpack.c.l.b16 %v339
      %v363 = vunpack.c.h.b16 %v339
      %v364 = vpack.c.b16 %v348, %v348
      %v365 = vpack.c.b16 %v349, %v349
      %v366 = vpack.c.b16 %v350, %v350
      %v367 = vpack.c.b16 %v351, %v351
      %v368 = vpack.c.b16 %v352, %v352
      %v369 = vpack.c.b16 %v353, %v353
      %v370 = vpack.c.b16 %v354, %v354
      %v371 = vpack.c.b16 %v355, %v355
      %v372 = vpack.c.b16 %v356, %v356
      %v373 = vpack.c.b16 %v357, %v357
      %v374 = vpack.c.b16 %v358, %v358
      %v375 = vpack.c.b16 %v359, %v359
      %v376 = vpack.c.b16 %v360, %v360
      %v377 = vpack.c.b16 %v361, %v361
      %v378 = vpack.c.b16 %v362, %v362
      %v379 = vpack.c.b16 %v363, %v363
      %396 = vst [vmem:[#allocation2] sm:$0xf] %v364
      %397 = vst [vmem:[#allocation2 + $0x4] sm:$0xf] %v365
      %398 = vst [vmem:[#allocation2 + $0x8] sm:$0xf] %v366
      %399 = vst [vmem:[#allocation2 + $0xc] sm:$0xf] %v367
      %400 = vst [vmem:[#allocation2 + $0x10] sm:$0xf] %v368
      %401 = vst [vmem:[#allocation2 + $0x14] sm:$0xf] %v369
      %402 = vst [vmem:[#allocation2 + $0x18] sm:$0xf] %v370
      %403 = vst [vmem:[#allocation2 + $0x1c] sm:$0xf] %v371
      %404 = vst [vmem:[#allocation2 + $0x20] sm:$0xf] %v372
      %405 = vst [vmem:[#allocation2 + $0x24] sm:$0xf] %v373
      %406 = vst [vmem:[#allocation2 + $0x28] sm:$0xf] %v374
      %407 = vst [vmem:[#allocation2 + $0x2c] sm:$0xf] %v375
      %408 = vst [vmem:[#allocation2 + $0x30] sm:$0xf] %v376
      %409 = vst [vmem:[#allocation2 + $0x34] sm:$0xf] %v377
      %410 = vst [vmem:[#allocation2 + $0x38] sm:$0xf] %v378
      %411 = vst [vmem:[#allocation2 + $0x3c] sm:$0xf] %v379
    $region17: #{sgl_forward.4} parent=1 // pred_fallthru
      _
    // Predicated region
    $region18: #{sgl_forward.4} parent=1 // pred_check
      _
    $region19: #{sgl_forward.4} parent=1 // pred_check_branch
      %413 = sbr.rel (0) target = $region21
    $region20: #{sgl_forward.4} parent=1 // pred_region
      _
    $region21: #{sgl_forward.4} parent=1 // pred_fallthru
      _
    // Predicated region
    $region22: #{sgl_forward.4} parent=1 // pred_check
      _
    $region23: #{sgl_forward.4} parent=1 // pred_check_branch
      %415 = sbr.rel (0) target = $region25
    $region24: #{sgl_forward.4} parent=1 // pred_region
      %s417 = ssub.s32 1024, 1024
      %418 = vsyncadd [#allocation3], %s417
      %s419 = sshll.u32 [#allocation2], 4
      %s420 = int_to_ptr.vmem [resolvable:$true] %s419
      %425 = dma.vmem_to_hbm [thread:$0]  %s420, 1024, %s3, [#allocation3], 64, 64, 4
    $region25: #{sgl_forward.4} parent=1 // pred_fallthru
      _
    // Predicated region
    $region26: #{sgl_forward.4} parent=1 // pred_check
      _
    $region27: #{sgl_forward.4} parent=1 // pred_check_branch
      %427 = sbr.rel (0) target = $region29
    $region28: #{sgl_forward.4} parent=1 // pred_region
      _
    $region29: #{sgl_forward.4} parent=1 // pred_fallthru
      _
    // Predicated region
    $region30: #{sgl_forward.4} parent=1 // pred_check
      _
    $region31: #{sgl_forward.4} parent=1 // pred_check_branch
      %429 = sbr.rel (0) target = $region33
    $region32: #{sgl_forward.4} parent=1 // pred_region
      %430 = dma.done [#allocation3], 1024
    $region33: #{sgl_forward.4} parent=1 // pred_fallthru
      _
    %431 = vsyncpa [#allocation3], 1

// kernel: sgl_forward.5
$region0: #{sgl_forward.5}
  #allocation0 [shape = 'u32[]', space=smem, size = 0x4, offset = 0x4, fixed_abs, tag = 'smem constant byte address 0x4 - core index']
  #allocation1 [shape = 'u32[144,128]{1,0:T(1,128)}', space=vmem, size = 0x12000, scoped, tag = 'internal scratch']
  %s0 = inlined_call_operand.vmem [shape: f32[8,128], index: 0, kind: input, shape index: {}, may-alias: {0,6,7}]
  %s1 = inlined_call_operand.vmem [shape: f32[8,128], index: 1, kind: input, shape index: {}, may-alias: {1,8,9}]
  %s2 = inlined_call_operand.vmem [shape: f32[8,128], index: 2, kind: input, shape index: {}]
  %s3 = inlined_call_operand.vmem [shape: f32[8,128], index: 3, kind: input, shape index: {}]
  %s4 = inlined_call_operand.vmem [shape: f32[8,128], index: 4, kind: input, shape index: {}]
  %s5 = inlined_call_operand.vmem [shape: f32[8,128], index: 5, kind: input, shape index: {}]
  %s6 = inlined_call_operand.vmem [shape: f32[8,128], index: 6, kind: input, shape index: {}, may-alias: {0,6,7}]
  %s7 = inlined_call_operand.vmem [shape: f32[8,128], index: 7, kind: input, shape index: {}, may-alias: {0,6,7}]
  %s8 = inlined_call_operand.vmem [shape: f32[8,128], index: 8, kind: input, shape index: {}, may-alias: {1,8,9}]
  %s9 = inlined_call_operand.vmem [shape: f32[8,128], index: 9, kind: input, shape index: {}, may-alias: {1,8,9}]
  %s10 = inlined_call_operand.vmem [shape: f32[1,128], index: 10, kind: output, shape index: {}]
  %s11 = sld [smem:[#allocation0]]
  $region54: #{sgl_forward.5} parent=0
    _
  %s13 = ssub.s32 1, %s11
  %s14 = scalar_select 0, %s13, %s11
  // Predicated region
  $region2: #{sgl_forward.5} parent=0 // pred_check
    _
  $region3: #{sgl_forward.5} parent=0 // pred_check_branch
    %16 = sbr.rel (0) target = $region5
  $region4: #{sgl_forward.5} parent=0 // pred_region
    _
  $region5: #{sgl_forward.5} parent=0 // pred_fallthru
    _
  // Predicated region
  $region6: #{sgl_forward.5} parent=0 // pred_check
    _
  $region7: #{sgl_forward.5} parent=0 // pred_check_branch
    %18 = sbr.rel (0) target = $region9
  $region8: #{sgl_forward.5} parent=0 // pred_region
    _
  $region9: #{sgl_forward.5} parent=0 // pred_fallthru
    _
  // Predicated region
  $region10: #{sgl_forward.5} parent=0 // pred_check
    _
  $region11: #{sgl_forward.5} parent=0 // pred_check_branch
    %20 = sbr.rel (0) target = $region13
  $region12: #{sgl_forward.5} parent=0 // pred_region
    _
  $region13: #{sgl_forward.5} parent=0 // pred_fallthru
    _
  // Predicated region
  $region14: #{sgl_forward.5} parent=0 // pred_check
    _
  $region15: #{sgl_forward.5} parent=0 // pred_check_branch
    %22 = sbr.rel (0) target = $region17
  $region16: #{sgl_forward.5} parent=0 // pred_region
    _
  $region17: #{sgl_forward.5} parent=0 // pred_fallthru
    _
  // Predicated region
  $region18: #{sgl_forward.5} parent=0 // pred_check
    _
  $region19: #{sgl_forward.5} parent=0 // pred_check_branch
    %24 = sbr.rel (0) target = $region21
  $region20: #{sgl_forward.5} parent=0 // pred_region
    _
  $region21: #{sgl_forward.5} parent=0 // pred_fallthru
    _
  // Predicated region
  $region22: #{sgl_forward.5} parent=0 // pred_check
    _
  $region23: #{sgl_forward.5} parent=0 // pred_check_branch
    %26 = sbr.rel (0) target = $region25
  $region24: #{sgl_forward.5} parent=0 // pred_region
    _
  $region25: #{sgl_forward.5} parent=0 // pred_fallthru
    _
  // Predicated region
  $region26: #{sgl_forward.5} parent=0 // pred_check
    _
  $region27: #{sgl_forward.5} parent=0 // pred_check_branch
    %28 = sbr.rel (0) target = $region29
  $region28: #{sgl_forward.5} parent=0 // pred_region
    _
  $region29: #{sgl_forward.5} parent=0 // pred_fallthru
    _
  // Predicated region
  $region30: #{sgl_forward.5} parent=0 // pred_check
    _
  $region31: #{sgl_forward.5} parent=0 // pred_check_branch
    %30 = sbr.rel (0) target = $region33
  $region32: #{sgl_forward.5} parent=0 // pred_region
    _
  $region33: #{sgl_forward.5} parent=0 // pred_fallthru
    _
  // Predicated region
  $region34: #{sgl_forward.5} parent=0 // pred_check
    _
  $region35: #{sgl_forward.5} parent=0 // pred_check_branch
    %32 = sbr.rel (0) target = $region37
  $region36: #{sgl_forward.5} parent=0 // pred_region
    _
  $region37: #{sgl_forward.5} parent=0 // pred_fallthru
    _
  // Predicated region
  $region38: #{sgl_forward.5} parent=0 // pred_check
    _
  $region39: #{sgl_forward.5} parent=0 // pred_check_branch
    %34 = sbr.rel (0) target = $region41
  $region40: #{sgl_forward.5} parent=0 // pred_region
    _
  $region41: #{sgl_forward.5} parent=0 // pred_fallthru
    _
  %p35 = scmp.eq.s32.totalorder 0, 0
  // Predicated region
  $region42: #{sgl_forward.5} parent=0 // pred_check
    %p36 = pneg %p35
  $region43: #{sgl_forward.5} parent=0 // pred_check_branch
    %38 = sbr.rel (%p36) target = $region45
  $region44: #{sgl_forward.5} parent=0 // pred_region
    %39 = vst [vmem:[%s10] sm:$0x1] 0.0
  $region45: #{sgl_forward.5} parent=0 // pred_fallthru
    _
  %s40 = smul.u32 0, 8
  %v41 = vlaneseq
  %v42 = vshrl.u32 %v41, 7
  %v43 = vstv %s40
  %v44 = vadd.s32 %v43, %v42
  %vm45 = vcmp.lt.s32.totalorder %v44, 8
  %v46 = vsel %vm45, 1, 0
  %v47 = vcvt.s32.f32 %v46
  %v48 = vld [vmem:[%s0] sm:$0xff]
  %v49 = vld [vmem:[%s1] sm:$0xff]
  %v50 = vmul.f32 %v48, %v49
  %51 = vadd.xlane.f32.xlu0 %v50
  %v52 = vpop.xlane.xlu0 %51
  %v53 = vld [vmem:[%s2] sm:$0xff]
  %v54 = vmul.f32 %v48, %v53
  %55 = vadd.xlane.f32.xlu0 %v54
  %v56 = vpop.xlane.xlu0 %55
  %v57 = vsub.f32 %v56, %v52
  %v58 = vmax.f32 %v57, 0.0
  %v59 = vand.u32 2147483647, %v57
  %v60 = vsub.f32 0.0, %v59
  %v61 = vmul.f32 %v60, 1.442695
  %v62 = vpow.pop %v61
  %v63 = vadd.f32 %v62, 1.0
  %v64 = vlog2.pop %v63
  %v65 = vmul.f32 %v64, 0.6931472
  %v66 = vadd.f32 %v58, %v65
  %v67 = vmul.f32 %v66, %v47
  %vm68 = vcmask 7168
  %v69 = vsel %vm68, %v67, 0.0
  %70 = vadd.xlane.f32.xlu0 %v69
  %v71 = vpop.xlane.xlu0 %70
  %v72 = vrot.slane %v71, 4
  %v73 = vadd.f32 %v71, %v72
  %v74 = vrot.slane %v73, 2
  %v75 = vadd.f32 %v73, %v74
  %v76 = vrot.slane %v75, 1
  %v77 = vadd.f32 %v75, %v76
  %s78 = vtos %v77
  %s79 = smul.f32 %s78, 0.125
  %v80 = vld [vmem:[%s3] sm:$0xff]
  %v81 = vmul.f32 %v80, %v80
  %82 = vadd.xlane.f32.xlu0 %v81
  %v83 = vpop.xlane.xlu0 %82
  %v84 = vrot.slane %v83, 4
  %v85 = vadd.f32 %v83, %v84
  %v86 = vrot.slane %v85, 2
  %v87 = vadd.f32 %v85, %v86
  %v88 = vrot.slane %v87, 1
  %v89 = vadd.f32 %v87, %v88
  %s90 = vtos %v89
  %v91 = vld [vmem:[%s4] sm:$0xff]
  %v92 = vmul.f32 %v91, %v91
  %93 = vadd.xlane.f32.xlu0 %v92
  %v94 = vpop.xlane.xlu0 %93
  %v95 = vrot.slane %v94, 4
  %v96 = vadd.f32 %v94, %v95
  %v97 = vrot.slane %v96, 2
  %v98 = vadd.f32 %v96, %v97
  %v99 = vrot.slane %v98, 1
  %v100 = vadd.f32 %v98, %v99
  %s101 = vtos %v100
  %s102 = sadd.f32 %s90, %s101
  %v103 = vld [vmem:[%s5] sm:$0xff]
  %v104 = vmul.f32 %v103, %v103
  %105 = vadd.xlane.f32.xlu0 %v104
  %v106 = vpop.xlane.xlu0 %105
  %v107 = vrot.slane %v106, 4
  %v108 = vadd.f32 %v106, %v107
  %v109 = vrot.slane %v108, 2
  %v110 = vadd.f32 %v108, %v109
  %v111 = vrot.slane %v110, 1
  %v112 = vadd.f32 %v110, %v111
  %s113 = vtos %v112
  %s114 = sadd.f32 %s102, %s113
  %s115 = smul.f32 %s114, 1e-05
  %v116 = vlaneseq
  %v117 = vand.u32 %v116, 127
  %vm118 = vcmp.lt.s32.totalorder %v117, 8
  %v119 = vld [vmem:[%s6] sm:$0xff]
  %v120 = vmul.f32 %v119, %v119
  %121 = vadd.xlane.f32.xlu0 %v120
  %v122 = vpop.xlane.xlu0 %121
  %v123 = vmax.f32 %v122, 1e-24
  %v124 = vrsqrt.pop %v123
  %v125 = vmul.f32 %v119, %v124
  %v126 = vld [vmem:[%s7] sm:$0xff]
  %v127 = vmul.f32 %v126, %v126
  %128 = vadd.xlane.f32.xlu0 %v127
  %v129 = vpop.xlane.xlu0 %128
  %v130 = vmax.f32 %v129, 1e-24
  %v131 = vrsqrt.pop %v130
  %v132 = vmul.f32 %v126, %v131
  %s133 = scalar_lea.vmem %s7, %s40
  %v134 = vld [vmem:[%s133] sm:$0xff]
  %v135 = vmul.f32 %v134, %v134
  %136 = vadd.xlane.f32.xlu0 %v135
  %v137 = vpop.xlane.xlu0 %136
  %v138 = vmax.f32 %v137, 1e-24
  %v139 = vrsqrt.pop %v138
  %v140 = vmul.f32 %v134, %v139
  %v141 = vmul.f32 %v125, %v140
  %142 = vadd.xlane.f32.xlu0 %v141
  %v143 = vpop.xlane.xlu0 %142
  %v144 = vmul.f32 %v143, 5.0
  %145 = vmatprep.subr.mxu0 0.0
  %146 = vmatpush1.xpose.msra.mxu0 %v132
  %147 = vmatprep.subr.mxu0 0.0
  %148 = vmatpush1.xpose.msra.mxu0 0.0
  %149 = vmatprep.subr.mxu0 0.0
  %150 = vmatpush1.xpose.msra.mxu0 0.0
  %151 = vmatprep.subr.mxu0 0.0
  %152 = vmatpush1.xpose.msra.mxu0 0.0
  %153 = vmatprep.subr.mxu0 0.0
  %154 = vmatpush1.xpose.msra.mxu0 0.0
  %155 = vmatprep.subr.mxu0 0.0
  %156 = vmatpush1.xpose.msra.mxu0 0.0
  %157 = vmatprep.subr.mxu0 0.0
  %158 = vmatpush1.xpose.msra.mxu0 0.0
  %159 = vmatprep.subr.mxu0 0.0
  %160 = vmatpush1.xpose.msra.mxu0 0.0
  %161 = vmatprep.subr.mxu0 0.0
  %162 = vmatpush1.xpose.msra.mxu0 0.0
  %163 = vmatprep.subr.mxu0 0.0
  %164 = vmatpush1.xpose.msra.mxu0 0.0
  %165 = vmatprep.subr.mxu0 0.0
  %166 = vmatpush1.xpose.msra.mxu0 0.0
  %167 = vmatprep.subr.mxu0 0.0
  %168 = vmatpush1.xpose.msra.mxu0 0.0
  %169 = vmatprep.subr.mxu0 0.0
  %170 = vmatpush1.xpose.msra.mxu0 0.0
  %171 = vmatprep.subr.mxu0 0.0
  %172 = vmatpush1.xpose.msra.mxu0 0.0
  %173 = vmatprep.subr.mxu0 0.0
  %174 = vmatpush1.xpose.msra.mxu0 0.0
  %175 = vmatprep.subr.mxu0 0.0
  %176 = vmatpush1.xpose.msra.mxu0 0.0
  %177 = vmatprep.subr.mxu0 0.0
  %178 = vmatpush1.xpose.msra.mxu0 0.0
  %179 = vmatprep.subr.mxu0 0.0
  %180 = vmatpush1.xpose.msra.mxu0 0.0
  %181 = vmatprep.subr.mxu0 0.0
  %182 = vmatpush1.xpose.msra.mxu0 0.0
  %183 = vmatprep.subr.mxu0 0.0
  %184 = vmatpush1.xpose.msra.mxu0 0.0
  %185 = vmatprep.subr.mxu0 0.0
  %186 = vmatpush1.xpose.msra.mxu0 0.0
  %187 = vmatprep.subr.mxu0 0.0
  %188 = vmatpush1.xpose.msra.mxu0 0.0
  %189 = vmatprep.subr.mxu0 0.0
  %190 = vmatpush1.xpose.msra.mxu0 0.0
  %191 = vmatprep.subr.mxu0 0.0
  %192 = vmatpush1.xpose.msra.mxu0 0.0
  %193 = vmatprep.subr.mxu0 0.0
  %194 = vmatpush1.xpose.msra.mxu0 0.0
  %195 = vmatprep.subr.mxu0 0.0
  %196 = vmatpush1.xpose.msra.mxu0 0.0
  %197 = vmatprep.subr.mxu0 0.0
  %198 = vmatpush1.xpose.msra.mxu0 0.0
  %199 = vmatprep.subr.mxu0 0.0
  %200 = vmatpush1.xpose.msra.mxu0 0.0
  %201 = vmatprep.subr.mxu0 0.0
  %202 = vmatpush1.xpose.msra.mxu0 0.0
  %203 = vmatprep.subr.mxu0 0.0
  %204 = vmatpush1.xpose.msra.mxu0 0.0
  %205 = vmatprep.subr.mxu0 0.0
  %206 = vmatpush1.xpose.msra.mxu0 0.0
  %207 = vmatprep.subr.mxu0 0.0
  %208 = vmatpush1.xpose.msra.mxu0 0.0
  %209 = vmatprep.mubr.f32.mxu0 0.0
  %210 = vmatmul.mubr.f32.gmra.mrb[0].mxu0 %v125
  %v211 = vpop.f32.mrb[0].mxu0
  %v212 = vadd.f32 0.0, %v211
  %v213 = vpop.f32.mrb[0].mxu0
  %214 = vdwg.mxu0
  %v215 = vmul.f32 %v212, 5.0
  %v216 = vsel %vm118, 1, 0
  %vm217 = vcmp.eq.s32.totalorder %v216, 1
  %v218 = vsel %vm217, %v215, -1e+30
  %vm219 = vcmask 64512
  %v220 = vsel %vm219, %v218, -inf
  %221 = vmax.xlane.f32.xlu0 %v220
  %v222 = vpop.xlane.xlu0 %221
  %v223 = vsub.f32 %v218, %v222
  %v224 = vmul.f32 %v223, 1.442695
  %v225 = vpow.pop %v224
  %v226 = vsel %vm219, %v225, 0.0
  %227 = vadd.xlane.f32.xlu0 %v226
  %v228 = vpop.xlane.xlu0 %227
  %v229 = vlog2.pop %v228
  %v230 = vmul.f32 %v229, 0.6931472
  %v231 = vadd.f32 %v222, %v230
  %v232 = vsub.f32 %v231, %v144
  %v233 = vmul.f32 %v232, %v47
  %v234 = vsel %vm68, %v233, 0.0
  %235 = vadd.xlane.f32.xlu0 %v234
  %v236 = vpop.xlane.xlu0 %235
  %v237 = vrot.slane %v236, 4
  %v238 = vadd.f32 %v236, %v237
  %v239 = vrot.slane %v238, 2
  %v240 = vadd.f32 %v238, %v239
  %v241 = vrot.slane %v240, 1
  %v242 = vadd.f32 %v240, %v241
  %s243 = vtos %v242
  %s244 = smul.f32 %s243, 0.125
  %v245 = vld [vmem:[%s8] sm:$0xff]
  %v246 = vmul.f32 %v245, %v245
  %247 = vadd.xlane.f32.xlu0 %v246
  %v248 = vpop.xlane.xlu0 %247
  %v249 = vmax.f32 %v248, 1e-24
  %v250 = vrsqrt.pop %v249
  %v251 = vmul.f32 %v245, %v250
  %v252 = vld [vmem:[%s9] sm:$0xff]
  %v253 = vmul.f32 %v252, %v252
  %254 = vadd.xlane.f32.xlu0 %v253
  %v255 = vpop.xlane.xlu0 %254
  %v256 = vmax.f32 %v255, 1e-24
  %v257 = vrsqrt.pop %v256
  %v258 = vmul.f32 %v252, %v257
  %s259 = scalar_lea.vmem %s9, %s40
  %v260 = vld [vmem:[%s259] sm:$0xff]
  %v261 = vmul.f32 %v260, %v260
  %262 = vadd.xlane.f32.xlu0 %v261
  %v263 = vpop.xlane.xlu0 %262
  %v264 = vmax.f32 %v263, 1e-24
  %v265 = vrsqrt.pop %v264
  %v266 = vmul.f32 %v260, %v265
  %v267 = vmul.f32 %v251, %v266
  %268 = vadd.xlane.f32.xlu0 %v267
  %v269 = vpop.xlane.xlu0 %268
  %v270 = vmul.f32 %v269, 5.0
  %271 = vmatprep.subr.mxu0 0.0
  %272 = vmatpush1.xpose.msra.mxu0 %v258
  %273 = vmatprep.subr.mxu0 0.0
  %274 = vmatpush1.xpose.msra.mxu0 0.0
  %275 = vmatprep.subr.mxu0 0.0
  %276 = vmatpush1.xpose.msra.mxu0 0.0
  %277 = vmatprep.subr.mxu0 0.0
  %278 = vmatpush1.xpose.msra.mxu0 0.0
  %279 = vmatprep.subr.mxu0 0.0
  %280 = vmatpush1.xpose.msra.mxu0 0.0
  %281 = vmatprep.subr.mxu0 0.0
  %282 = vmatpush1.xpose.msra.mxu0 0.0
  %283 = vmatprep.subr.mxu0 0.0
  %284 = vmatpush1.xpose.msra.mxu0 0.0
  %285 = vmatprep.subr.mxu0 0.0
  %286 = vmatpush1.xpose.msra.mxu0 0.0
  %287 = vmatprep.subr.mxu0 0.0
  %288 = vmatpush1.xpose.msra.mxu0 0.0
  %289 = vmatprep.subr.mxu0 0.0
  %290 = vmatpush1.xpose.msra.mxu0 0.0
  %291 = vmatprep.subr.mxu0 0.0
  %292 = vmatpush1.xpose.msra.mxu0 0.0
  %293 = vmatprep.subr.mxu0 0.0
  %294 = vmatpush1.xpose.msra.mxu0 0.0
  %295 = vmatprep.subr.mxu0 0.0
  %296 = vmatpush1.xpose.msra.mxu0 0.0
  %297 = vmatprep.subr.mxu0 0.0
  %298 = vmatpush1.xpose.msra.mxu0 0.0
  %299 = vmatprep.subr.mxu0 0.0
  %300 = vmatpush1.xpose.msra.mxu0 0.0
  %301 = vmatprep.subr.mxu0 0.0
  %302 = vmatpush1.xpose.msra.mxu0 0.0
  %303 = vmatprep.subr.mxu0 0.0
  %304 = vmatpush1.xpose.msra.mxu0 0.0
  %305 = vmatprep.subr.mxu0 0.0
  %306 = vmatpush1.xpose.msra.mxu0 0.0
  %307 = vmatprep.subr.mxu0 0.0
  %308 = vmatpush1.xpose.msra.mxu0 0.0
  %309 = vmatprep.subr.mxu0 0.0
  %310 = vmatpush1.xpose.msra.mxu0 0.0
  %311 = vmatprep.subr.mxu0 0.0
  %312 = vmatpush1.xpose.msra.mxu0 0.0
  %313 = vmatprep.subr.mxu0 0.0
  %314 = vmatpush1.xpose.msra.mxu0 0.0
  %315 = vmatprep.subr.mxu0 0.0
  %316 = vmatpush1.xpose.msra.mxu0 0.0
  %317 = vmatprep.subr.mxu0 0.0
  %318 = vmatpush1.xpose.msra.mxu0 0.0
  %319 = vmatprep.subr.mxu0 0.0
  %320 = vmatpush1.xpose.msra.mxu0 0.0
  %321 = vmatprep.subr.mxu0 0.0
  %322 = vmatpush1.xpose.msra.mxu0 0.0
  %323 = vmatprep.subr.mxu0 0.0
  %324 = vmatpush1.xpose.msra.mxu0 0.0
  %325 = vmatprep.subr.mxu0 0.0
  %326 = vmatpush1.xpose.msra.mxu0 0.0
  %327 = vmatprep.subr.mxu0 0.0
  %328 = vmatpush1.xpose.msra.mxu0 0.0
  %329 = vmatprep.subr.mxu0 0.0
  %330 = vmatpush1.xpose.msra.mxu0 0.0
  %331 = vmatprep.subr.mxu0 0.0
  %332 = vmatpush1.xpose.msra.mxu0 0.0
  %333 = vmatprep.subr.mxu0 0.0
  %334 = vmatpush1.xpose.msra.mxu0 0.0
  %335 = vmatprep.mubr.f32.mxu0 0.0
  %336 = vmatmul.mubr.f32.gmra.mrb[0].mxu0 %v251
  %v337 = vpop.f32.mrb[0].mxu0
  %v338 = vadd.f32 0.0, %v337
  %v339 = vpop.f32.mrb[0].mxu0
  %340 = vdwg.mxu0
  %v341 = vmul.f32 %v338, 5.0
  %v342 = vsel %vm217, %v341, -1e+30
  %v343 = vsel %vm219, %v342, -inf
  %344 = vmax.xlane.f32.xlu0 %v343
  %v345 = vpop.xlane.xlu0 %344
  %v346 = vsub.f32 %v342, %v345
  %v347 = vmul.f32 %v346, 1.442695
  %v348 = vpow.pop %v347
  %v349 = vsel %vm219, %v348, 0.0
  %350 = vadd.xlane.f32.xlu0 %v349
  %v351 = vpop.xlane.xlu0 %350
  %v352 = vlog2.pop %v351
  %v353 = vmul.f32 %v352, 0.6931472
  %v354 = vadd.f32 %v345, %v353
  %v355 = vsub.f32 %v354, %v270
  %v356 = vmul.f32 %v355, %v47
  %v357 = vsel %vm68, %v356, 0.0
  %358 = vadd.xlane.f32.xlu0 %v357
  %v359 = vpop.xlane.xlu0 %358
  %v360 = vrot.slane %v359, 4
  %v361 = vadd.f32 %v359, %v360
  %v362 = vrot.slane %v361, 2
  %v363 = vadd.f32 %v361, %v362
  %v364 = vrot.slane %v363, 1
  %v365 = vadd.f32 %v363, %v364
  %s366 = vtos %v365
  %s367 = smul.f32 %s366, 0.125
  %s368 = sadd.f32 %s244, %s367
  %s369 = smul.f32 %s368, 0.1
  %v370 = vld [vmem:[%s10] sm:$0x1]
  %vm371 = vcmp.eq.s32.totalorder %v117, 0
  %v372 = vstv %s79
  %v373 = vsel %vm371, %v372, 0.0
  %vm374 = vcmp.eq.s32.totalorder %v117, 2
  %v375 = vstv %s369
  %v376 = vsel %vm374, %v375, 0.0
  %v377 = vadd.f32 %v373, %v376
  %vm378 = vcmp.eq.s32.totalorder %v117, 3
  %v379 = vstv %s115
  %v380 = vsel %vm378, %v379, 0.0
  %v381 = vadd.f32 %v377, %v380
  %v382 = vadd.f32 %v370, %v381
  %383 = vst [vmem:[%s10] sm:$0x1] %v382
  // Predicated region
  $region46: #{sgl_forward.5} parent=0 // pred_check
    _
  $region47: #{sgl_forward.5} parent=0 // pred_check_branch
    %385 = sbr.rel (0) target = $region49
  $region48: #{sgl_forward.5} parent=0 // pred_region
    _
  $region49: #{sgl_forward.5} parent=0 // pred_fallthru
    _
  // Predicated region
  $region50: #{sgl_forward.5} parent=0 // pred_check
    _
  $region51: #{sgl_forward.5} parent=0 // pred_check_branch
    %387 = sbr.rel (0) target = $region53
  $region52: #{sgl_forward.5} parent=0 // pred_region
    _
  $region53: #{sgl_forward.5} parent=0 // pred_fallthru
    _

</llo_original>
